<compile_context>
chip_gen: v5e
topology: v5e:2x2
jax: 0.10.0
libtpu: 0.0.40
codegen_flags: <defaults>
</compile_context>

<pallas_src>
import math

import jax
import jax.numpy as jnp
from jax import lax
from jax.experimental import pallas as pl
from jax.experimental.pallas import tpu as pltpu

BN_EPS = 1e-5

WEIGHT_NAMES = [
    "emb_x", "graph", "graph_T",
    "selfW_h", "selfW_e", "self_b",
    "fs_w2", "fs_b2",
    "neighW_h", "embc_neigh",
    "fnW2", "fnb2",
    "ea_cw", "eaW", "ea_b",
    "gru_wih", "gru_whh", "gru_bih", "gru_bhh",
    "pr_w", "pr_b",
]


def _sigmoid(x):
    return 1.0 / (1.0 + jnp.exp(-x))


def gkt_seq_kernel(
    # full-sequence int32 index streams, VMEM-resident
    xt_ref, qt_ref, qn_ref,
    # resident packed weights
    embx_ref, graph_ref, graphT_ref,
    selfW_h_ref, selfW_e_ref, self_b_ref,
    fs_w2_ref, fs_b2_ref,
    neighW_h_ref, embc_neigh_ref,
    fnW2_ref, fnb2_ref,
    ea_cw_ref, eaW_ref, ea_b_ref,
    gru_wih_ref, gru_whh_ref, gru_bih_ref, gru_bhh_ref,
    pr_w_ref, pr_b_ref,
    # output [S, B]
    pred_ref,
    # scratch: hidden knowledge state carried across the in-kernel time loop
    ht_ref,
):
    S = pred_ref.shape[0]
    BC, H = ht_ref.shape
    C = graph_ref.shape[0]
    B = BC // C
    H2 = 2 * H
    f32 = jnp.float32

    ht_ref[...] = jnp.zeros_like(ht_ref)

    # ---- loop-invariant hoists (JAX does not CSE broadcast_in_dim inside loops) ----
    iota_x = lax.broadcasted_iota(jnp.int32, (B, 2 * C), 1)
    iota_c = lax.broadcasted_iota(jnp.int32, (B, C), 1)
    embc_neigh = embc_neigh_ref[...][None]      # [1, C, 2H]
    cw = ea_cw_ref[...][None]                   # [1, C, 1]
    pr_w = pr_w_ref[...]                        # [1, H]
    pr_b = pr_b_ref[0, 0]

    def step(t, carry):
        xt = xt_ref[t]            # [B, 1] int32
        qt = qt_ref[t]            # [B, 1]
        qn = qn_ref[t]            # [B, 1] (-1 on the last step -> all-zero one-hot)

        ht2 = ht_ref[...]         # [B*C, H]
        ht3 = ht2.reshape(B, C, H)

        # ---- in-kernel one-hot masks (no HBM one-hot arrays) ----
        x_oh = (iota_x == xt).astype(f32)                                     # [B, 2C]
        q_oh = (iota_c == qt).astype(f32)                                     # [B, C]
        qn_oh = (iota_c == qn).astype(f32)                                    # [B, C]

        # ---- _aggregate / row gathers ----
        res_emb = jnp.dot(x_oh, embx_ref[...], preferred_element_type=f32)    # [B, E]
        adj = jnp.dot(q_oh, graph_ref[...], preferred_element_type=f32)       # [B, C]
        radj = jnp.dot(q_oh, graphT_ref[...], preferred_element_type=f32)     # [B, C]

        qmask = q_oh[:, :, None]                                              # [B, C, 1]
        h_sel = jnp.sum(qmask * ht3, axis=1)                                  # [B, H] = ht[b, qt_b]

        # ---- fused first layer: f_self (cols 0:H) + self-ht halves of fn0/fn1 (cols H:3H) ----
        self_lin = (jnp.dot(h_sel, selfW_h_ref[...], preferred_element_type=f32)
                    + jnp.dot(res_emb, selfW_e_ref[...], preferred_element_type=f32)
                    + self_b_ref[...])                                        # [B, 3H]

        fs_a1 = jnp.maximum(self_lin[:, :H], 0.0)                             # [B, H]
        self_feat = jnp.maximum(
            jnp.dot(fs_a1, fs_w2_ref[...], preferred_element_type=f32) + fs_b2_ref[...],
            0.0)                                                              # [B, H] (bn folded)

        fn_self = self_lin[:, H:]                                             # [B, 2H]

        # ---- _agg_neighbors: fused fn0||fn1 (qt row of this is discarded below) ----
        ht_lin = jnp.dot(ht2, neighW_h_ref[...], preferred_element_type=f32)  # [B*C, 2H]
        pre1 = ht_lin.reshape(B, C, H2) + fn_self[:, None, :] + embc_neigh    # [B, C, 2H]
        a1 = jnp.maximum(pre1, 0.0).reshape(B * C, H2)
        n_cat = jnp.maximum(
            jnp.dot(a1, fnW2_ref[...], preferred_element_type=f32) + fnb2_ref[...],
            0.0).reshape(B, C, H2)                                            # [B, C, 2H]
        neigh_feat = (adj[:, :, None] * n_cat[..., :H]
                      + radj[:, :, None] * n_cat[..., H:])                    # [B, C, H]

        m_next = qmask * self_feat[:, None, :] + (1.0 - qmask) * neigh_feat   # [B, C, H]

        # ---- EraseAddGate (fused erase||add matmul) ----
        m2d = m_next.reshape(B * C, H)
        ga = (jnp.dot(m2d, eaW_ref[...], preferred_element_type=f32)
              + ea_b_ref[...]).reshape(B, C, H2)
        erase = _sigmoid(ga[..., :H])
        addf = jnp.tanh(ga[..., H:])
        m_gated = m_next - cw * erase * m_next + cw * addf                    # [B, C, H]

        # ---- GRUCell (r|z|n fused into [H, 3H] weights) ----
        x2d = m_gated.reshape(B * C, H)
        gi = jnp.dot(x2d, gru_wih_ref[...], preferred_element_type=f32) + gru_bih_ref[...]
        gh = jnp.dot(ht2, gru_whh_ref[...], preferred_element_type=f32) + gru_bhh_ref[...]
        r = _sigmoid(gi[:, :H] + gh[:, :H])
        z = _sigmoid(gi[:, H:2 * H] + gh[:, H:2 * H])
        n = jnp.tanh(gi[:, 2 * H:] + r * gh[:, 2 * H:])
        h_new = (1.0 - z) * n + z * ht2                                       # [B*C, H]
        ht_ref[...] = h_new

        # ---- _predict + _get_next_pred: gather at q_{t+1}, VPU dot with pr_w ----
        h_next_sel = jnp.sum(qn_oh[:, :, None] * h_new.reshape(B, C, H), axis=1)  # [B, H]
        logit = jnp.sum(h_next_sel * pr_w, axis=-1) + pr_b                        # [B]
        pred_ref[pl.ds(t, 1), :] = _sigmoid(logit)[None, :]
        return carry

    lax.fori_loop(0, S, step, 0)


# ---------------- host-side weight packing (fusion + BN folding) ----------------
def pack_params(p):
    bn = jnp.float32(1.0 / math.sqrt(1.0 + BN_EPS))
    H = p["fs_w2"].shape[0]
    E = p["emb_x"].shape[1]
    D = H + E
    fs_w1, fn0_w1, fn1_w1 = p["fs_w1"], p["fn0_w1"], p["fn1_w1"]

    w = {}
    w["emb_x"] = p["emb_x"]
    w["graph"] = p["graph"]
    w["graph_T"] = p["graph_T"]   # kept explicit so reverse-adjacency is a row gather
    # fused first layer: [f_self | fn0_self | fn1_self]
    w["selfW_h"] = jnp.concatenate([fs_w1[:H], fn0_w1[:H], fn1_w1[:H]], axis=1)          # [H, 3H]
    w["selfW_e"] = jnp.concatenate([fs_w1[H:], fn0_w1[H:D], fn1_w1[H:D]], axis=1)        # [E, 3H]
    w["self_b"] = jnp.concatenate([p["fs_b1"], p["fn0_b1"], p["fn1_b1"]], axis=1)        # [1, 3H]
    # f_self second layer with eval-BN scale folded in (scale > 0 commutes with relu)
    w["fs_w2"] = p["fs_w2"] * bn
    w["fs_b2"] = p["fs_b2"] * bn
    # fn0||fn1 first layer, ht part + precomputed emb_c part
    w["neighW_h"] = jnp.concatenate([fn0_w1[D:D + H], fn1_w1[D:D + H]], axis=1)          # [H, 2H]
    w["embc_neigh"] = p["emb_c"] @ jnp.concatenate([fn0_w1[D + H:], fn1_w1[D + H:]],
                                                   axis=1)                               # [C, 2H]
    # fn0||fn1 second layer as block-diagonal (BN folded)
    zeros = jnp.zeros((H, H), jnp.float32)
    w["fnW2"] = jnp.concatenate(
        [jnp.concatenate([p["fn0_w2"] * bn, zeros], axis=1),
         jnp.concatenate([zeros, p["fn1_w2"] * bn], axis=1)], axis=0)                    # [2H, 2H]
    w["fnb2"] = jnp.concatenate([p["fn0_b2"], p["fn1_b2"]], axis=1) * bn                 # [1, 2H]
    # EraseAddGate
    w["ea_cw"] = p["ea_w"]                                                               # [C, 1]
    w["eaW"] = jnp.concatenate([p["er_w"], p["ad_w"]], axis=1)                           # [H, 2H]
    w["ea_b"] = jnp.concatenate([p["er_b"], p["ad_b"]], axis=1)                          # [1, 2H]
    # GRU (r|z|n fused)
    w["gru_wih"] = jnp.concatenate([p["gru_wih"][0], p["gru_wih"][1], p["gru_wih"][2]], axis=1)
    w["gru_whh"] = jnp.concatenate([p["gru_whh"][0], p["gru_whh"][1], p["gru_whh"][2]], axis=1)
    w["gru_bih"] = jnp.concatenate([p["gru_bih"][0], p["gru_bih"][1], p["gru_bih"][2]], axis=1)
    w["gru_bhh"] = jnp.concatenate([p["gru_bhh"][0], p["gru_bhh"][1], p["gru_bhh"][2]], axis=1)
    # prediction head as a lane-row + scalar bias (no N=1 matmul in kernel)
    w["pr_w"] = p["pr_w"].T                                                              # [1, H]
    w["pr_b"] = p["pr_b"]                                                                # [1, 1]
    return w


def gkt_forward_pallas(features, questions, params, concept_total, hidden_dim, embedding_dim):
    """features, questions: int32 [B, S]. Returns pred_res [B, S-1] float32."""
    B, S = features.shape
    C, H = concept_total, hidden_dim
    E = embedding_dim

    # Glue: tiny int32 index streams only (no dense one-hot HBM arrays).
    xt_seq = features.T.astype(jnp.int32)[:, :, None]                                    # [S, B, 1]
    qt_seq = questions.T.astype(jnp.int32)[:, :, None]                                   # [S, B, 1]
    q_next = jnp.concatenate([questions[:, 1:], -jnp.ones((B, 1), questions.dtype)], axis=1)
    qn_seq = q_next.T.astype(jnp.int32)[:, :, None]                                      # [S, B, 1]

    w = pack_params(params)
    weights = [w[name] for name in WEIGHT_NAMES]

    # VMEM budget + advisory cost estimate sized from the actual footprint.
    weight_bytes = sum(int(x.size) * 4 for x in weights)
    scratch_bytes = B * C * H * 4
    stream_bytes = 3 * S * B * 4
    out_bytes = S * B * 4
    footprint = weight_bytes + scratch_bytes + stream_bytes + out_bytes
    vmem_limit = int(min(96 << 20, max(32 << 20, 4 * footprint + (1 << 20))))

    def mm(m, k, n):
        return 2 * m * k * n

    flops_step = (
        mm(B, 2 * C, E) + 2 * mm(B, C, C)            # one-hot gathers
        + mm(B, H, 3 * H) + mm(B, E, 3 * H)          # fused self first layer
        + mm(B, H, H)                                # f_self second layer
        + mm(B * C, H, 2 * H)                        # neighbor first layer (ht part)
        + mm(B * C, 2 * H, 2 * H)                    # neighbor second layer (block-diag)
        + mm(B * C, H, 2 * H)                        # erase||add
        + 2 * mm(B * C, H, 3 * H)                    # GRU gates
    )
    cost = pl.CostEstimate(
        flops=int(S * flops_step),
        transcendentals=int(S * (5 * B * C * H + B)),
        bytes_accessed=int(footprint),
    )

    pred_all = pl.pallas_call(
        gkt_seq_kernel,
        out_shape=jax.ShapeDtypeStruct((S, B), jnp.float32),
        scratch_shapes=[pltpu.VMEM((B * C, H), jnp.float32)],
        compiler_params=pltpu.CompilerParams(vmem_limit_bytes=vmem_limit),
        cost_estimate=cost,
    )(xt_seq, qt_seq, qn_seq, *weights)

    return pred_all[:-1].T                                                               # [B, S-1]


# ---------------- deterministic parameter construction ----------------
def make_params(key, concept_num_arg, hidden_dim, embedding_dim):
    C = concept_num_arg + 1
    H, E = hidden_dim, embedding_dim
    D = H + E
    ks = jax.random.split(key, 20)

    def nrm(k, shape, scale):
        return (scale * jax.random.normal(k, shape)).astype(jnp.float32)

    def linear(k, din, dout):
        k1, _ = jax.random.split(k)
        wm = nrm(k1, (din, dout), 1.0 / math.sqrt(din))
        b = jnp.full((1, dout), 0.1, jnp.float32)
        return wm, b

    p = {}
    p["emb_x"] = nrm(ks[0], (2 * C, E), 0.1)
    emb_c = nrm(ks[1], (C, E), 0.1)
    p["emb_c"] = emb_c.at[C - 1].set(0.0)            # padding_idx=-1 row zeroed
    p["graph"] = jax.random.uniform(ks[2], (C, C), jnp.float32)   # PAM graph
    p["graph_T"] = p["graph"].T

    p["fs_w1"], p["fs_b1"] = linear(ks[3], D, H)
    p["fs_w2"], p["fs_b2"] = linear(ks[4], H, H)
    p["fn0_w1"], p["fn0_b1"] = linear(ks[5], 2 * D, H)
    p["fn0_w2"], p["fn0_b2"] = linear(ks[6], H, H)
    p["fn1_w1"], p["fn1_b1"] = linear(ks[7], 2 * D, H)
    p["fn1_w2"], p["fn1_b2"] = linear(ks[8], H, H)

    stdv = 1.0 / math.sqrt(C)
    p["ea_w"] = jax.random.uniform(ks[9], (C, 1), jnp.float32, -stdv, stdv)
    p["er_w"], p["er_b"] = linear(ks[10], H, H)
    p["ad_w"], p["ad_b"] = linear(ks[11], H, H)

    gs = 1.0 / math.sqrt(H)
    p["gru_wih"] = nrm(ks[12], (3, H, H), gs)        # stacked (r, z, n), stored [in, out]
    p["gru_whh"] = nrm(ks[13], (3, H, H), gs)
    p["gru_bih"] = nrm(ks[14], (3, 1, H), gs)
    p["gru_bhh"] = nrm(ks[15], (3, 1, H), gs)

    p["pr_w"], p["pr_b"] = linear(ks[16], H, 1)
    return p


# ---------------- plain-JAX reference (mirrors the PyTorch forward) ----------------
def gkt_forward_ref(features, questions, p, C, H, E):
    B, S = features.shape
    bn = 1.0 / math.sqrt(1.0 + BN_EPS)

    def mlp(x, w1, b1, w2, b2):
        h = jnp.maximum(x @ w1 + b1, 0.0)
        h = jnp.maximum(h @ w2 + b2, 0.0)
        return h * bn

    ht = jnp.zeros((B, C, H), jnp.float32)
    arB = jnp.arange(B)
    preds = []
    for t in range(S):
        xt = features[:, t]
        qt = questions[:, t]
        res_emb = p["emb_x"][xt]
        concept_emb = jnp.broadcast_to(p["emb_c"][None], (B, C, E))
        concept_emb = concept_emb.at[arB, qt].set(res_emb)
        tmp_ht = jnp.concatenate([ht, concept_emb], axis=-1)
        self_ht = tmp_ht[arB, qt]
        self_feat = mlp(self_ht, p["fs_w1"], p["fs_b1"], p["fs_w2"], p["fs_b2"])
        neigh_ht = jnp.concatenate(
            [jnp.broadcast_to(self_ht[:, None, :], tmp_ht.shape), tmp_ht], axis=-1)
        n0 = mlp(neigh_ht, p["fn0_w1"], p["fn0_b1"], p["fn0_w2"], p["fn0_b2"])
        n1 = mlp(neigh_ht, p["fn1_w1"], p["fn1_b1"], p["fn1_w2"], p["fn1_b2"])
        adj = p["graph"][qt, :][:, :, None]
        radj = p["graph"][:, qt].T[:, :, None]
        neigh_feat = adj * n0 + radj * n1
        m_next = neigh_feat.at[arB, qt].set(self_feat)
        erase = jax.nn.sigmoid(m_next @ p["er_w"] + p["er_b"])
        addf = jnp.tanh(m_next @ p["ad_w"] + p["ad_b"])
        w = p["ea_w"][None, :, :]
        m_gated = m_next - w * erase * m_next + w * addf
        x2 = m_gated.reshape(B * C, H)
        h2 = ht.reshape(B * C, H)
        r = jax.nn.sigmoid(x2 @ p["gru_wih"][0] + p["gru_bih"][0]
                           + h2 @ p["gru_whh"][0] + p["gru_bhh"][0])
        z = jax.nn.sigmoid(x2 @ p["gru_wih"][1] + p["gru_bih"][1]
                           + h2 @ p["gru_whh"][1] + p["gru_bhh"][1])
        n = jnp.tanh(x2 @ p["gru_wih"][2] + p["gru_bih"][2]
                     + r * (h2 @ p["gru_whh"][2] + p["gru_bhh"][2]))
        h_next = ((1.0 - z) * n + z * h2).reshape(B, C, H)
        ht = h_next
        y = jax.nn.sigmoid(h_next @ p["pr_w"] + p["pr_b"])[..., 0]
        if t < S - 1:
            qn_oh = jax.nn.one_hot(questions[:, t + 1], C, dtype=jnp.float32)
            preds.append(jnp.sum(y * qn_oh, axis=1))
    return jnp.stack(preds, axis=1)


if __name__ == "__main__":
    concept_num = 15            # model-internal concept_num = 16
    hidden_dim = 32
    embedding_dim = 32
    B, S = 2, 8
    C = concept_num + 1

    key = jax.random.PRNGKey(0)
    kp, kq, ka = jax.random.split(key, 3)
    params = make_params(kp, concept_num, hidden_dim, embedding_dim)

    # synthetic inputs: valid question ids (no -1 padding), xt = qt + answer * C
    questions = jax.random.randint(kq, (B, S), 0, concept_num, dtype=jnp.int32)
    answers = jax.random.randint(ka, (B, S), 0, 2, dtype=jnp.int32)
    features = questions + answers * C

    pred = gkt_forward_pallas(features, questions, params, C, hidden_dim, embedding_dim)
    pred = jax.block_until_ready(pred)
    assert pred.shape == (B, S - 1)

    ref = gkt_forward_ref(features, questions, params, C, hidden_dim, embedding_dim)
    err = float(jnp.max(jnp.abs(pred - ref)))
    assert err < 5e-2, f"mismatch vs reference: max abs err = {err}"

    print("KERNEL_OK")
</pallas_src>

<mosaic_0001>
module attributes {stable_mosaic.version = 11 : i64} {
  func.func @gkt_seq_kernel(%arg0: memref<8x2x1xi32, #tpu.memory_space<vmem>>, %arg1: memref<8x2x1xi32, #tpu.memory_space<vmem>>, %arg2: memref<8x2x1xi32, #tpu.memory_space<vmem>>, %arg3: memref<32x32xf32, #tpu.memory_space<vmem>>, %arg4: memref<16x16xf32, #tpu.memory_space<vmem>>, %arg5: memref<16x16xf32, #tpu.memory_space<vmem>>, %arg6: memref<32x96xf32, #tpu.memory_space<vmem>>, %arg7: memref<32x96xf32, #tpu.memory_space<vmem>>, %arg8: memref<1x96xf32, #tpu.memory_space<vmem>>, %arg9: memref<32x32xf32, #tpu.memory_space<vmem>>, %arg10: memref<1x32xf32, #tpu.memory_space<vmem>>, %arg11: memref<32x64xf32, #tpu.memory_space<vmem>>, %arg12: memref<16x64xf32, #tpu.memory_space<vmem>>, %arg13: memref<64x64xf32, #tpu.memory_space<vmem>>, %arg14: memref<1x64xf32, #tpu.memory_space<vmem>>, %arg15: memref<16x1xf32, #tpu.memory_space<vmem>>, %arg16: memref<32x64xf32, #tpu.memory_space<vmem>>, %arg17: memref<1x64xf32, #tpu.memory_space<vmem>>, %arg18: memref<32x96xf32, #tpu.memory_space<vmem>>, %arg19: memref<32x96xf32, #tpu.memory_space<vmem>>, %arg20: memref<1x96xf32, #tpu.memory_space<vmem>>, %arg21: memref<1x96xf32, #tpu.memory_space<vmem>>, %arg22: memref<1x32xf32, #tpu.memory_space<vmem>>, %arg23: memref<1x1xf32, #tpu.memory_space<vmem>>, %arg24: memref<8x2xf32, #tpu.memory_space<vmem>>, %arg25: memref<32x32xf32, #tpu.memory_space<vmem>>) attributes {dimension_semantics = [], scalar_prefetch = 0 : i64, scratch_operands = 1 : i64, tpu.core_type = #tpu.core_type<tc>} {
    %cst = arith.constant 0.000000e+00 : f32
    %0 = vector.broadcast %cst : f32 to vector<32x32xf32>
    %c0 = arith.constant 0 : index
    %c0_0 = arith.constant 0 : index
    %1 = vector.load %arg25[%c0, %c0_0] : memref<32x32xf32, #tpu.memory_space<vmem>>, vector<32x32xf32>
    tpu.vector_store %arg25[%c0, %c0_0], %0 {strides = array<i32>} : memref<32x32xf32, #tpu.memory_space<vmem>>, vector<32x32xf32>,
    %2 = tpu.iota {dimensions = array<i32: 1>} : vector<2x32xi32>
    %3 = tpu.iota {dimensions = array<i32: 1>} : vector<2x16xi32>
    %c0_1 = arith.constant 0 : index
    %c0_2 = arith.constant 0 : index
    %4 = vector.load %arg12[%c0_1, %c0_2] : memref<16x64xf32, #tpu.memory_space<vmem>>, vector<16x64xf32>
    %5 = vector.shape_cast %4 : vector<16x64xf32> to vector<1x16x64xf32>
    %c0_3 = arith.constant 0 : index
    %c0_4 = arith.constant 0 : index
    %6 = vector.load %arg15[%c0_3, %c0_4] : memref<16x1xf32, #tpu.memory_space<vmem>>, vector<16x1xf32>
    %7 = vector.shape_cast %6 : vector<16x1xf32> to vector<1x16x1xf32>
    %c0_5 = arith.constant 0 : index
    %c0_6 = arith.constant 0 : index
    %8 = vector.load %arg22[%c0_5, %c0_6] : memref<1x32xf32, #tpu.memory_space<vmem>>, vector<1x32xf32>
    %c0_7 = arith.constant 0 : index
    %c0_8 = arith.constant 0 : index
    %9 = vector.load %arg23[%c0_7, %c0_8] : memref<1x1xf32, #tpu.memory_space<vmem>>, vector<1x1xf32>
    %10 = vector.extract %9[0, 0] : f32 from vector<1x1xf32>
    %c0_i32 = arith.constant 0 : i32
    %c8_i32 = arith.constant 8 : i32
    %11 = arith.addi %c0_i32, %c8_i32 : i32
    %c1_i32 = arith.constant 1 : i32
    scf.for %arg26 = %c0_i32 to %11 step %c1_i32  : i32 {
      %12 = arith.index_cast %arg26 : i32 to index
      %c0_10 = arith.constant 0 : index
      %c0_11 = arith.constant 0 : index
      %13 = vector.load %arg0[%12, %c0_10, %c0_11] : memref<8x2x1xi32, #tpu.memory_space<vmem>>, vector<1x2x1xi32>
      %14 = vector.shape_cast %13 : vector<1x2x1xi32> to vector<2x1xi32>
      %15 = arith.index_cast %arg26 : i32 to index
      %c0_12 = arith.constant 0 : index
      %c0_13 = arith.constant 0 : index
      %16 = vector.load %arg1[%15, %c0_12, %c0_13] : memref<8x2x1xi32, #tpu.memory_space<vmem>>, vector<1x2x1xi32>
      %17 = vector.shape_cast %16 : vector<1x2x1xi32> to vector<2x1xi32>
      %18 = arith.index_cast %arg26 : i32 to index
      %c0_14 = arith.constant 0 : index
      %c0_15 = arith.constant 0 : index
      %19 = vector.load %arg2[%18, %c0_14, %c0_15] : memref<8x2x1xi32, #tpu.memory_space<vmem>>, vector<1x2x1xi32>
      %20 = vector.shape_cast %19 : vector<1x2x1xi32> to vector<2x1xi32>
      %c0_16 = arith.constant 0 : index
      %c0_17 = arith.constant 0 : index
      %21 = vector.load %arg25[%c0_16, %c0_17] : memref<32x32xf32, #tpu.memory_space<vmem>>, vector<32x32xf32>
      %22 = vector.shape_cast %21 : vector<32x32xf32> to vector<2x16x32xf32>
      %23 = vector.broadcast %14 : vector<2x1xi32> to vector<2x32xi32>
      %24 = arith.cmpi eq, %2, %23 : vector<2x32xi32>
      %25 = arith.extui %24 : vector<2x32xi1> to vector<2x32xi32>
      %26 = arith.sitofp %25 : vector<2x32xi32> to vector<2x32xf32>
      %27 = vector.broadcast %17 : vector<2x1xi32> to vector<2x16xi32>
      %28 = arith.cmpi eq, %3, %27 : vector<2x16xi32>
      %29 = arith.extui %28 : vector<2x16xi1> to vector<2x16xi32>
      %30 = arith.sitofp %29 : vector<2x16xi32> to vector<2x16xf32>
      %31 = vector.broadcast %20 : vector<2x1xi32> to vector<2x16xi32>
      %32 = arith.cmpi eq, %3, %31 : vector<2x16xi32>
      %33 = arith.extui %32 : vector<2x16xi1> to vector<2x16xi32>
      %34 = arith.sitofp %33 : vector<2x16xi32> to vector<2x16xf32>
      %c0_18 = arith.constant 0 : index
      %c0_19 = arith.constant 0 : index
      %35 = vector.load %arg3[%c0_18, %c0_19] : memref<32x32xf32, #tpu.memory_space<vmem>>, vector<32x32xf32>
      %cst_20 = arith.constant dense<0.000000e+00> : vector<2x32xf32>
      %36 = tpu.matmul %26, %35, %cst_20 {dimension_numbers = #tpu.dot_dimension_numbers<[1], [0], [0], [1], [0, 0, 1, 1], [], []>} : vector<2x32xf32>, vector<32x32xf32>, vector<2x32xf32> -> vector<2x32xf32>
      %c0_21 = arith.constant 0 : index
      %c0_22 = arith.constant 0 : index
      %37 = vector.load %arg4[%c0_21, %c0_22] : memref<16x16xf32, #tpu.memory_space<vmem>>, vector<16x16xf32>
      %cst_23 = arith.constant dense<0.000000e+00> : vector<2x16xf32>
      %38 = tpu.matmul %30, %37, %cst_23 {dimension_numbers = #tpu.dot_dimension_numbers<[1], [0], [0], [1], [0, 0, 1, 1], [], []>} : vector<2x16xf32>, vector<16x16xf32>, vector<2x16xf32> -> vector<2x16xf32>
      %c0_24 = arith.constant 0 : index
      %c0_25 = arith.constant 0 : index
      %39 = vector.load %arg5[%c0_24, %c0_25] : memref<16x16xf32, #tpu.memory_space<vmem>>, vector<16x16xf32>
      %cst_26 = arith.constant dense<0.000000e+00> : vector<2x16xf32>
      %40 = tpu.matmul %30, %39, %cst_26 {dimension_numbers = #tpu.dot_dimension_numbers<[1], [0], [0], [1], [0, 0, 1, 1], [], []>} : vector<2x16xf32>, vector<16x16xf32>, vector<2x16xf32> -> vector<2x16xf32>
      %41 = vector.shape_cast %30 : vector<2x16xf32> to vector<2x16x1xf32>
      %42 = vector.broadcast %41 : vector<2x16x1xf32> to vector<2x16x32xf32>
      %43 = arith.mulf %42, %22 : vector<2x16x32xf32>
      %cst_27 = arith.constant dense<0.000000e+00> : vector<2x32xf32>
      %44 = vector.multi_reduction <add>, %43, %cst_27 [1] : vector<2x16x32xf32> to vector<2x32xf32>
      %c0_28 = arith.constant 0 : index
      %c0_29 = arith.constant 0 : index
      %45 = vector.load %arg6[%c0_28, %c0_29] : memref<32x96xf32, #tpu.memory_space<vmem>>, vector<32x96xf32>
      %cst_30 = arith.constant dense<0.000000e+00> : vector<2x96xf32>
      %46 = tpu.matmul %44, %45, %cst_30 {dimension_numbers = #tpu.dot_dimension_numbers<[1], [0], [0], [1], [0, 0, 1, 1], [], []>} : vector<2x32xf32>, vector<32x96xf32>, vector<2x96xf32> -> vector<2x96xf32>
      %c0_31 = arith.constant 0 : index
      %c0_32 = arith.constant 0 : index
      %47 = vector.load %arg7[%c0_31, %c0_32] : memref<32x96xf32, #tpu.memory_space<vmem>>, vector<32x96xf32>
      %cst_33 = arith.constant dense<0.000000e+00> : vector<2x96xf32>
      %48 = tpu.matmul %36, %47, %cst_33 {dimension_numbers = #tpu.dot_dimension_numbers<[1], [0], [0], [1], [0, 0, 1, 1], [], []>} : vector<2x32xf32>, vector<32x96xf32>, vector<2x96xf32> -> vector<2x96xf32>
      %49 = arith.addf %46, %48 : vector<2x96xf32>
      %c0_34 = arith.constant 0 : index
      %c0_35 = arith.constant 0 : index
      %50 = vector.load %arg8[%c0_34, %c0_35] : memref<1x96xf32, #tpu.memory_space<vmem>>, vector<1x96xf32>
      %51 = vector.broadcast %50 : vector<1x96xf32> to vector<2x96xf32>
      %52 = arith.addf %49, %51 : vector<2x96xf32>
      %53 = vector.extract_strided_slice %52 {offsets = [0, 0], sizes = [2, 32], strides = [1, 1]} : vector<2x96xf32> to vector<2x32xf32>
      %cst_36 = arith.constant 0.000000e+00 : f32
      %54 = vector.broadcast %cst_36 : f32 to vector<2x32xf32>
      %55 = arith.maximumf %53, %54 : vector<2x32xf32>
      %c0_37 = arith.constant 0 : index
      %c0_38 = arith.constant 0 : index
      %56 = vector.load %arg9[%c0_37, %c0_38] : memref<32x32xf32, #tpu.memory_space<vmem>>, vector<32x32xf32>
      %cst_39 = arith.constant dense<0.000000e+00> : vector<2x32xf32>
      %57 = tpu.matmul %55, %56, %cst_39 {dimension_numbers = #tpu.dot_dimension_numbers<[1], [0], [0], [1], [0, 0, 1, 1], [], []>} : vector<2x32xf32>, vector<32x32xf32>, vector<2x32xf32> -> vector<2x32xf32>
      %c0_40 = arith.constant 0 : index
      %c0_41 = arith.constant 0 : index
      %58 = vector.load %arg10[%c0_40, %c0_41] : memref<1x32xf32, #tpu.memory_space<vmem>>, vector<1x32xf32>
      %59 = vector.broadcast %58 : vector<1x32xf32> to vector<2x32xf32>
      %60 = arith.addf %57, %59 : vector<2x32xf32>
      %cst_42 = arith.constant 0.000000e+00 : f32
      %61 = vector.broadcast %cst_42 : f32 to vector<2x32xf32>
      %62 = arith.maximumf %60, %61 : vector<2x32xf32>
      %63 = vector.extract_strided_slice %52 {offsets = [0, 32], sizes = [2, 64], strides = [1, 1]} : vector<2x96xf32> to vector<2x64xf32>
      %c0_43 = arith.constant 0 : index
      %c0_44 = arith.constant 0 : index
      %64 = vector.load %arg11[%c0_43, %c0_44] : memref<32x64xf32, #tpu.memory_space<vmem>>, vector<32x64xf32>
      %cst_45 = arith.constant dense<0.000000e+00> : vector<32x64xf32>
      %65 = tpu.matmul %21, %64, %cst_45 {dimension_numbers = #tpu.dot_dimension_numbers<[1], [0], [0], [1], [0, 0, 1, 1], [], []>} : vector<32x32xf32>, vector<32x64xf32>, vector<32x64xf32> -> vector<32x64xf32>
      %66 = vector.shape_cast %65 : vector<32x64xf32> to vector<2x16x64xf32>
      %67 = vector.shape_cast %63 : vector<2x64xf32> to vector<2x1x64xf32>
      %68 = vector.broadcast %67 : vector<2x1x64xf32> to vector<2x16x64xf32>
      %69 = arith.addf %66, %68 : vector<2x16x64xf32>
      %70 = vector.broadcast %5 : vector<1x16x64xf32> to vector<2x16x64xf32>
      %71 = arith.addf %69, %70 : vector<2x16x64xf32>
      %cst_46 = arith.constant 0.000000e+00 : f32
      %72 = vector.broadcast %cst_46 : f32 to vector<2x16x64xf32>
      %73 = arith.maximumf %71, %72 : vector<2x16x64xf32>
      %74 = vector.shape_cast %73 : vector<2x16x64xf32> to vector<32x64xf32>
      %c0_47 = arith.constant 0 : index
      %c0_48 = arith.constant 0 : index
      %75 = vector.load %arg13[%c0_47, %c0_48] : memref<64x64xf32, #tpu.memory_space<vmem>>, vector<64x64xf32>
      %cst_49 = arith.constant dense<0.000000e+00> : vector<32x64xf32>
      %76 = tpu.matmul %74, %75, %cst_49 {dimension_numbers = #tpu.dot_dimension_numbers<[1], [0], [0], [1], [0, 0, 1, 1], [], []>} : vector<32x64xf32>, vector<64x64xf32>, vector<32x64xf32> -> vector<32x64xf32>
      %c0_50 = arith.constant 0 : index
      %c0_51 = arith.constant 0 : index
      %77 = vector.load %arg14[%c0_50, %c0_51] : memref<1x64xf32, #tpu.memory_space<vmem>>, vector<1x64xf32>
      %78 = vector.broadcast %77 : vector<1x64xf32> to vector<32x64xf32>
      %79 = arith.addf %76, %78 : vector<32x64xf32>
      %cst_52 = arith.constant 0.000000e+00 : f32
      %80 = vector.broadcast %cst_52 : f32 to vector<32x64xf32>
      %81 = arith.maximumf %79, %80 : vector<32x64xf32>
      %82 = vector.shape_cast %81 : vector<32x64xf32> to vector<2x16x64xf32>
      %83 = vector.shape_cast %38 : vector<2x16xf32> to vector<2x16x1xf32>
      %84 = vector.extract_strided_slice %82 {offsets = [0, 0, 0], sizes = [2, 16, 32], strides = [1, 1, 1]} : vector<2x16x64xf32> to vector<2x16x32xf32>
      %85 = vector.broadcast %83 : vector<2x16x1xf32> to vector<2x16x32xf32>
      %86 = arith.mulf %85, %84 : vector<2x16x32xf32>
      %87 = vector.shape_cast %40 : vector<2x16xf32> to vector<2x16x1xf32>
      %88 = vector.extract_strided_slice %82 {offsets = [0, 0, 32], sizes = [2, 16, 32], strides = [1, 1, 1]} : vector<2x16x64xf32> to vector<2x16x32xf32>
      %89 = vector.broadcast %87 : vector<2x16x1xf32> to vector<2x16x32xf32>
      %90 = arith.mulf %89, %88 : vector<2x16x32xf32>
      %91 = arith.addf %86, %90 : vector<2x16x32xf32>
      %92 = vector.shape_cast %62 : vector<2x32xf32> to vector<2x1x32xf32>
      %93 = vector.broadcast %41 : vector<2x16x1xf32> to vector<2x16x32xf32>
      %94 = vector.broadcast %92 : vector<2x1x32xf32> to vector<2x16x32xf32>
      %95 = arith.mulf %93, %94 : vector<2x16x32xf32>
      %cst_53 = arith.constant 1.000000e+00 : f32
      %96 = vector.broadcast %cst_53 : f32 to vector<2x16x1xf32>
      %97 = arith.subf %96, %41 : vector<2x16x1xf32>
      %98 = vector.broadcast %97 : vector<2x16x1xf32> to vector<2x16x32xf32>
      %99 = arith.mulf %98, %91 : vector<2x16x32xf32>
      %100 = arith.addf %95, %99 : vector<2x16x32xf32>
      %101 = vector.shape_cast %100 : vector<2x16x32xf32> to vector<32x32xf32>
      %c0_54 = arith.constant 0 : index
      %c0_55 = arith.constant 0 : index
      %102 = vector.load %arg16[%c0_54, %c0_55] : memref<32x64xf32, #tpu.memory_space<vmem>>, vector<32x64xf32>
      %cst_56 = arith.constant dense<0.000000e+00> : vector<32x64xf32>
      %103 = tpu.matmul %101, %102, %cst_56 {dimension_numbers = #tpu.dot_dimension_numbers<[1], [0], [0], [1], [0, 0, 1, 1], [], []>} : vector<32x32xf32>, vector<32x64xf32>, vector<32x64xf32> -> vector<32x64xf32>
      %c0_57 = arith.constant 0 : index
      %c0_58 = arith.constant 0 : index
      %104 = vector.load %arg17[%c0_57, %c0_58] : memref<1x64xf32, #tpu.memory_space<vmem>>, vector<1x64xf32>
      %105 = vector.broadcast %104 : vector<1x64xf32> to vector<32x64xf32>
      %106 = arith.addf %103, %105 : vector<32x64xf32>
      %107 = vector.shape_cast %106 : vector<32x64xf32> to vector<2x16x64xf32>
      %108 = vector.extract_strided_slice %107 {offsets = [0, 0, 0], sizes = [2, 16, 32], strides = [1, 1, 1]} : vector<2x16x64xf32> to vector<2x16x32xf32>
      %cst_59 = arith.constant 0.000000e+00 : f32
      %109 = vector.broadcast %cst_59 : f32 to vector<2x16x32xf32>
      %110 = arith.subf %109, %108 : vector<2x16x32xf32>
      %111 = math.exp %110 : vector<2x16x32xf32>
      %cst_60 = arith.constant 1.000000e+00 : f32
      %112 = vector.broadcast %cst_60 : f32 to vector<2x16x32xf32>
      %113 = arith.addf %112, %111 : vector<2x16x32xf32>
      %cst_61 = arith.constant 1.000000e+00 : f32
      %114 = vector.broadcast %cst_61 : f32 to vector<2x16x32xf32>
      %115 = arith.divf %114, %113 : vector<2x16x32xf32>
      %116 = vector.extract_strided_slice %107 {offsets = [0, 0, 32], sizes = [2, 16, 32], strides = [1, 1, 1]} : vector<2x16x64xf32> to vector<2x16x32xf32>
      %117 = math.tanh %116 : vector<2x16x32xf32>
      %118 = vector.broadcast %7 : vector<1x16x1xf32> to vector<2x16x32xf32>
      %119 = arith.mulf %118, %115 : vector<2x16x32xf32>
      %120 = arith.mulf %119, %100 : vector<2x16x32xf32>
      %121 = arith.subf %100, %120 : vector<2x16x32xf32>
      %122 = vector.broadcast %7 : vector<1x16x1xf32> to vector<2x16x32xf32>
      %123 = arith.mulf %122, %117 : vector<2x16x32xf32>
      %124 = arith.addf %121, %123 : vector<2x16x32xf32>
      %125 = vector.shape_cast %124 : vector<2x16x32xf32> to vector<32x32xf32>
      %c0_62 = arith.constant 0 : index
      %c0_63 = arith.constant 0 : index
      %126 = vector.load %arg18[%c0_62, %c0_63] : memref<32x96xf32, #tpu.memory_space<vmem>>, vector<32x96xf32>
      %cst_64 = arith.constant dense<0.000000e+00> : vector<32x96xf32>
      %127 = tpu.matmul %125, %126, %cst_64 {dimension_numbers = #tpu.dot_dimension_numbers<[1], [0], [0], [1], [0, 0, 1, 1], [], []>} : vector<32x32xf32>, vector<32x96xf32>, vector<32x96xf32> -> vector<32x96xf32>
      %c0_65 = arith.constant 0 : index
      %c0_66 = arith.constant 0 : index
      %128 = vector.load %arg20[%c0_65, %c0_66] : memref<1x96xf32, #tpu.memory_space<vmem>>, vector<1x96xf32>
      %129 = vector.broadcast %128 : vector<1x96xf32> to vector<32x96xf32>
      %130 = arith.addf %127, %129 : vector<32x96xf32>
      %c0_67 = arith.constant 0 : index
      %c0_68 = arith.constant 0 : index
      %131 = vector.load %arg19[%c0_67, %c0_68] : memref<32x96xf32, #tpu.memory_space<vmem>>, vector<32x96xf32>
      %cst_69 = arith.constant dense<0.000000e+00> : vector<32x96xf32>
      %132 = tpu.matmul %21, %131, %cst_69 {dimension_numbers = #tpu.dot_dimension_numbers<[1], [0], [0], [1], [0, 0, 1, 1], [], []>} : vector<32x32xf32>, vector<32x96xf32>, vector<32x96xf32> -> vector<32x96xf32>
      %c0_70 = arith.constant 0 : index
      %c0_71 = arith.constant 0 : index
      %133 = vector.load %arg21[%c0_70, %c0_71] : memref<1x96xf32, #tpu.memory_space<vmem>>, vector<1x96xf32>
      %134 = vector.broadcast %133 : vector<1x96xf32> to vector<32x96xf32>
      %135 = arith.addf %132, %134 : vector<32x96xf32>
      %136 = vector.extract_strided_slice %130 {offsets = [0, 0], sizes = [32, 32], strides = [1, 1]} : vector<32x96xf32> to vector<32x32xf32>
      %137 = vector.extract_strided_slice %135 {offsets = [0, 0], sizes = [32, 32], strides = [1, 1]} : vector<32x96xf32> to vector<32x32xf32>
      %138 = arith.addf %136, %137 : vector<32x32xf32>
      %cst_72 = arith.constant 0.000000e+00 : f32
      %139 = vector.broadcast %cst_72 : f32 to vector<32x32xf32>
      %140 = arith.subf %139, %138 : vector<32x32xf32>
      %141 = math.exp %140 : vector<32x32xf32>
      %cst_73 = arith.constant 1.000000e+00 : f32
      %142 = vector.broadcast %cst_73 : f32 to vector<32x32xf32>
      %143 = arith.addf %142, %141 : vector<32x32xf32>
      %cst_74 = arith.constant 1.000000e+00 : f32
      %144 = vector.broadcast %cst_74 : f32 to vector<32x32xf32>
      %145 = arith.divf %144, %143 : vector<32x32xf32>
      %146 = vector.extract_strided_slice %130 {offsets = [0, 32], sizes = [32, 32], strides = [1, 1]} : vector<32x96xf32> to vector<32x32xf32>
      %147 = vector.extract_strided_slice %135 {offsets = [0, 32], sizes = [32, 32], strides = [1, 1]} : vector<32x96xf32> to vector<32x32xf32>
      %148 = arith.addf %146, %147 : vector<32x32xf32>
      %cst_75 = arith.constant 0.000000e+00 : f32
      %149 = vector.broadcast %cst_75 : f32 to vector<32x32xf32>
      %150 = arith.subf %149, %148 : vector<32x32xf32>
      %151 = math.exp %150 : vector<32x32xf32>
      %cst_76 = arith.constant 1.000000e+00 : f32
      %152 = vector.broadcast %cst_76 : f32 to vector<32x32xf32>
      %153 = arith.addf %152, %151 : vector<32x32xf32>
      %cst_77 = arith.constant 1.000000e+00 : f32
      %154 = vector.broadcast %cst_77 : f32 to vector<32x32xf32>
      %155 = arith.divf %154, %153 : vector<32x32xf32>
      %156 = vector.extract_strided_slice %130 {offsets = [0, 64], sizes = [32, 32], strides = [1, 1]} : vector<32x96xf32> to vector<32x32xf32>
      %157 = vector.extract_strided_slice %135 {offsets = [0, 64], sizes = [32, 32], strides = [1, 1]} : vector<32x96xf32> to vector<32x32xf32>
      %158 = arith.mulf %145, %157 : vector<32x32xf32>
      %159 = arith.addf %156, %158 : vector<32x32xf32>
      %160 = math.tanh %159 : vector<32x32xf32>
      %cst_78 = arith.constant 1.000000e+00 : f32
      %161 = vector.broadcast %cst_78 : f32 to vector<32x32xf32>
      %162 = arith.subf %161, %155 : vector<32x32xf32>
      %163 = arith.mulf %162, %160 : vector<32x32xf32>
      %164 = arith.mulf %155, %21 : vector<32x32xf32>
      %165 = arith.addf %163, %164 : vector<32x32xf32>
      %c0_79 = arith.constant 0 : index
      %c0_80 = arith.constant 0 : index
      %166 = vector.load %arg25[%c0_79, %c0_80] : memref<32x32xf32, #tpu.memory_space<vmem>>, vector<32x32xf32>
      tpu.vector_store %arg25[%c0_79, %c0_80], %165 {strides = array<i32>} : memref<32x32xf32, #tpu.memory_space<vmem>>, vector<32x32xf32>,
      %167 = vector.shape_cast %34 : vector<2x16xf32> to vector<2x16x1xf32>
      %168 = vector.shape_cast %165 : vector<32x32xf32> to vector<2x16x32xf32>
      %169 = vector.broadcast %167 : vector<2x16x1xf32> to vector<2x16x32xf32>
      %170 = arith.mulf %169, %168 : vector<2x16x32xf32>
      %cst_81 = arith.constant dense<0.000000e+00> : vector<2x32xf32>
      %171 = vector.multi_reduction <add>, %170, %cst_81 [1] : vector<2x16x32xf32> to vector<2x32xf32>
      %172 = vector.broadcast %8 : vector<1x32xf32> to vector<2x32xf32>
      %173 = arith.mulf %171, %172 : vector<2x32xf32>
      %cst_82 = arith.constant dense<0.000000e+00> : vector<2xf32>
      %174 = vector.multi_reduction <add>, %173, %cst_82 [1] : vector<2x32xf32> to vector<2xf32>
      %175 = vector.broadcast %10 : f32 to vector<2xf32>
      %176 = arith.addf %174, %175 : vector<2xf32>
      %cst_83 = arith.constant 0.000000e+00 : f32
      %177 = vector.broadcast %cst_83 : f32 to vector<2xf32>
      %178 = arith.subf %177, %176 : vector<2xf32>
      %179 = math.exp %178 : vector<2xf32>
      %cst_84 = arith.constant 1.000000e+00 : f32
      %180 = vector.broadcast %cst_84 : f32 to vector<2xf32>
      %181 = arith.addf %180, %179 : vector<2xf32>
      %cst_85 = arith.constant 1.000000e+00 : f32
      %182 = vector.broadcast %cst_85 : f32 to vector<2xf32>
      %183 = arith.divf %182, %181 : vector<2xf32>
      %184 = vector.shape_cast %183 : vector<2xf32> to vector<1x2xf32>
      %185 = arith.index_cast %arg26 : i32 to index
      %c0_86 = arith.constant 0 : index
      %186 = vector.load %arg24[%185, %c0_86] : memref<8x2xf32, #tpu.memory_space<vmem>>, vector<1x2xf32>
      tpu.vector_store %arg24[%185, %c0_86], %184 {strides = array<i32>} : memref<8x2xf32, #tpu.memory_space<vmem>>, vector<1x2xf32>,
    }
    %c8_i32_9 = arith.constant 8 : i32
    return
  }
}

</mosaic_0001>

<llo_original>
// kernel: tpu_custom_call.1
$region0: #{tpu_custom_call.1}
  #allocation0 [shape = 'u32[]', space=smem, size = 0x4, offset = 0x4, fixed_abs, tag = 'smem constant byte address 0x4 - core index']
  #allocation1 [shape = 'u32[72,128]{1,0:T(1,128)}', space=vmem, size = 0x9000, scoped, tag = 'internal scratch']
  #allocation2 [shape = 'f32[32,32]{1,0:T(8,128)}', space=vmem, size = 0x4000, scoped, tag = 'scratch operand']
  #allocation3 [shape = 'f32[1,1]{1,0:T(1,128)S(1)}', space=vmem, size = 0x200, scoped, tag = 'scoped memory for tpu_custom_call.1']
  %s0 = inlined_call_operand.vmem [shape: s32[8,2,1], index: 0, kind: input, shape index: {}]
  %s1 = inlined_call_operand.vmem [shape: s32[8,2,1], index: 1, kind: input, shape index: {}]
  %s2 = inlined_call_operand.vmem [shape: s32[8,2,1], index: 2, kind: input, shape index: {}]
  %s3 = inlined_call_operand.hbm [shape: f32[32,32], index: 3, kind: input, shape index: {}]
  %s4 = inlined_call_operand.vmem [shape: f32[16,16], index: 4, kind: input, shape index: {}]
  %s5 = inlined_call_operand.hbm [shape: f32[16,16], index: 5, kind: input, shape index: {}]
  %s6 = inlined_call_operand.hbm [shape: f32[32,96], index: 6, kind: input, shape index: {}]
  %s7 = inlined_call_operand.hbm [shape: f32[32,96], index: 7, kind: input, shape index: {}]
  %s8 = inlined_call_operand.vmem [shape: f32[1,96], index: 8, kind: input, shape index: {}]
  %s9 = inlined_call_operand.hbm [shape: f32[32,32], index: 9, kind: input, shape index: {}]
  %s10 = inlined_call_operand.vmem [shape: f32[1,32], index: 10, kind: input, shape index: {}]
  %s11 = inlined_call_operand.hbm [shape: f32[32,64], index: 11, kind: input, shape index: {}]
  %s12 = inlined_call_operand.hbm [shape: f32[16,64], index: 12, kind: input, shape index: {}]
  %s13 = inlined_call_operand.vmem [shape: f32[64,64], index: 13, kind: input, shape index: {}]
  %s14 = inlined_call_operand.vmem [shape: f32[1,64], index: 14, kind: input, shape index: {}]
  %s15 = inlined_call_operand.vmem [shape: f32[16,1], index: 15, kind: input, shape index: {}]
  %s16 = inlined_call_operand.hbm [shape: f32[32,64], index: 16, kind: input, shape index: {}]
  %s17 = inlined_call_operand.vmem [shape: f32[1,64], index: 17, kind: input, shape index: {}]
  %s18 = inlined_call_operand.hbm [shape: f32[32,96], index: 18, kind: input, shape index: {}]
  %s19 = inlined_call_operand.hbm [shape: f32[32,96], index: 19, kind: input, shape index: {}]
  %s20 = inlined_call_operand.vmem [shape: f32[1,96], index: 20, kind: input, shape index: {}]
  %s21 = inlined_call_operand.vmem [shape: f32[1,96], index: 21, kind: input, shape index: {}]
  %s22 = inlined_call_operand.vmem [shape: f32[1,32], index: 22, kind: input, shape index: {}]
  %s23 = inlined_call_operand.<no memory space> [shape: f32[1,1], index: 23, kind: input, shape index: {}]
  %s24 = inlined_call_operand.vmem [shape: f32[8,2], index: 24, kind: output, shape index: {}]
  %s25 = sld [smem:[#allocation0]]
  $region153: #{tpu_custom_call.1} parent=0
    _
  %s27 = ssub.s32 1, %s25
  %s28 = scalar_select 0, %s27, %s25
  %v29 = vstv %s23
  %30 = vst [vmem:[#allocation3] sm:$0x1] %v29
  $region1: #{tpu_custom_call.1} parent=0
    #allocation4 [shape = 'u8[16384]{0}', space=vmem, size = 0x4000, scoped, tag = 'input window, operand 3, single buffered']
    #allocation5 [shape = 's32[1]{0}', space=sflag, size = 0x4, scoped, tag = 'scoped memory for tpu_custom_call.1']
    #allocation6 [shape = 'u8[8192]{0}', space=vmem, size = 0x2000, scoped, tag = 'input window, operand 5, single buffered']
    #allocation7 [shape = 's32[1]{0}', space=sflag, size = 0x4, scoped, tag = 'scoped memory for tpu_custom_call.1']
    #allocation8 [shape = 'u8[16384]{0}', space=vmem, size = 0x4000, scoped, tag = 'input window, operand 6, single buffered']
    #allocation9 [shape = 'u8[16384]{0}', space=vmem, size = 0x4000, scoped, tag = 'input window, operand 7, single buffered']
    #allocation10 [shape = 's32[1]{0}', space=sflag, size = 0x4, scoped, tag = 'scoped memory for tpu_custom_call.1']
    #allocation11 [shape = 'u8[16384]{0}', space=vmem, size = 0x4000, scoped, tag = 'input window, operand 9, single buffered']
    #allocation12 [shape = 'u8[16384]{0}', space=vmem, size = 0x4000, scoped, tag = 'input window, operand 11, single buffered']
    #allocation13 [shape = 's32[1]{0}', space=sflag, size = 0x4, scoped, tag = 'scoped memory for tpu_custom_call.1']
    #allocation14 [shape = 'u8[8192]{0}', space=vmem, size = 0x2000, scoped, tag = 'input window, operand 12, single buffered']
    #allocation15 [shape = 'u8[16384]{0}', space=vmem, size = 0x4000, scoped, tag = 'input window, operand 16, single buffered']
    #allocation16 [shape = 's32[1]{0}', space=sflag, size = 0x4, scoped, tag = 'scoped memory for tpu_custom_call.1']
    #allocation17 [shape = 'u8[16384]{0}', space=vmem, size = 0x4000, scoped, tag = 'input window, operand 18, single buffered']
    #allocation18 [shape = 'u8[16384]{0}', space=vmem, size = 0x4000, scoped, tag = 'input window, operand 19, single buffered']
    #allocation19 [shape = 's32[1]{0}', space=sflag, size = 0x4, scoped, tag = 'scoped memory for tpu_custom_call.1']
    %31 = vsyncpa [#allocation5], 0
    %32 = vsyncpa [#allocation7], 0
    %33 = vsyncpa [#allocation10], 0
    %34 = vsyncpa [#allocation13], 0
    %35 = vsyncpa [#allocation16], 0
    %36 = vsyncpa [#allocation19], 0
    // Predicated region
    $region2: #{tpu_custom_call.1} parent=1 // pred_check
      _
    $region3: #{tpu_custom_call.1} parent=1 // pred_check_branch
      %38 = sbr.rel (0) target = $region5
    $region4: #{tpu_custom_call.1} parent=1 // pred_region
      _
    $region5: #{tpu_custom_call.1} parent=1 // pred_fallthru
      _
    // Predicated region
    $region6: #{tpu_custom_call.1} parent=1 // pred_check
      _
    $region7: #{tpu_custom_call.1} parent=1 // pred_check_branch
      %40 = sbr.rel (0) target = $region9
    $region8: #{tpu_custom_call.1} parent=1 // pred_region
      _
    $region9: #{tpu_custom_call.1} parent=1 // pred_fallthru
      _
    // Predicated region
    $region10: #{tpu_custom_call.1} parent=1 // pred_check
      _
    $region11: #{tpu_custom_call.1} parent=1 // pred_check_branch
      %42 = sbr.rel (0) target = $region13
    $region12: #{tpu_custom_call.1} parent=1 // pred_region
      _
    $region13: #{tpu_custom_call.1} parent=1 // pred_fallthru
      _
    // Predicated region
    $region14: #{tpu_custom_call.1} parent=1 // pred_check
      _
    $region15: #{tpu_custom_call.1} parent=1 // pred_check_branch
      %44 = sbr.rel (0) target = $region17
    $region16: #{tpu_custom_call.1} parent=1 // pred_region
      %46 = vsyncadd [#allocation5], 0
      %s47 = sshll.u32 %s3, 4
      %s48 = int_to_ptr.hbm [resolvable:$true] %s47
      %s49 = sshll.u32 [#allocation4], 4
      %s50 = int_to_ptr.vmem [resolvable:$true] %s49
      %55 = dma.hbm_to_vmem [thread:$0]  %s48, 512, %s50, [#allocation5], 128, 128, 8
    $region17: #{tpu_custom_call.1} parent=1 // pred_fallthru
      _
    // Predicated region
    $region18: #{tpu_custom_call.1} parent=1 // pred_check
      _
    $region19: #{tpu_custom_call.1} parent=1 // pred_check_branch
      %57 = sbr.rel (0) target = $region21
    $region20: #{tpu_custom_call.1} parent=1 // pred_region
      _
    $region21: #{tpu_custom_call.1} parent=1 // pred_fallthru
      _
    // Predicated region
    $region22: #{tpu_custom_call.1} parent=1 // pred_check
      _
    $region23: #{tpu_custom_call.1} parent=1 // pred_check_branch
      %59 = sbr.rel (0) target = $region25
    $region24: #{tpu_custom_call.1} parent=1 // pred_region
      %61 = vsyncadd [#allocation7], 0
      %s62 = sshll.u32 %s5, 4
      %s63 = int_to_ptr.hbm [resolvable:$true] %s62
      %s64 = sshll.u32 [#allocation6], 4
      %s65 = int_to_ptr.vmem [resolvable:$true] %s64
      %70 = dma.hbm_to_vmem [thread:$0]  %s63, 256, %s65, [#allocation7], 128, 128, 8
    $region25: #{tpu_custom_call.1} parent=1 // pred_fallthru
      _
    // Predicated region
    $region26: #{tpu_custom_call.1} parent=1 // pred_check
      _
    $region27: #{tpu_custom_call.1} parent=1 // pred_check_branch
      %72 = sbr.rel (0) target = $region29
    $region28: #{tpu_custom_call.1} parent=1 // pred_region
      %74 = vsyncadd [#allocation7], 0
      %s75 = sshll.u32 %s6, 4
      %s76 = int_to_ptr.hbm [resolvable:$true] %s75
      %s77 = sshll.u32 [#allocation8], 4
      %s78 = int_to_ptr.vmem [resolvable:$true] %s77
      %83 = dma.hbm_to_vmem [thread:$0]  %s76, 512, %s78, [#allocation7], 128, 128, 8
    $region29: #{tpu_custom_call.1} parent=1 // pred_fallthru
      _
    // Predicated region
    $region30: #{tpu_custom_call.1} parent=1 // pred_check
      _
    $region31: #{tpu_custom_call.1} parent=1 // pred_check_branch
      %85 = sbr.rel (0) target = $region33
    $region32: #{tpu_custom_call.1} parent=1 // pred_region
      %87 = vsyncadd [#allocation10], 0
      %s88 = sshll.u32 %s7, 4
      %s89 = int_to_ptr.hbm [resolvable:$true] %s88
      %s90 = sshll.u32 [#allocation9], 4
      %s91 = int_to_ptr.vmem [resolvable:$true] %s90
      %96 = dma.hbm_to_vmem [thread:$0]  %s89, 512, %s91, [#allocation10], 128, 128, 8
    $region33: #{tpu_custom_call.1} parent=1 // pred_fallthru
      _
    // Predicated region
    $region34: #{tpu_custom_call.1} parent=1 // pred_check
      _
    $region35: #{tpu_custom_call.1} parent=1 // pred_check_branch
      %98 = sbr.rel (0) target = $region37
    $region36: #{tpu_custom_call.1} parent=1 // pred_region
      _
    $region37: #{tpu_custom_call.1} parent=1 // pred_fallthru
      _
    // Predicated region
    $region38: #{tpu_custom_call.1} parent=1 // pred_check
      _
    $region39: #{tpu_custom_call.1} parent=1 // pred_check_branch
      %100 = sbr.rel (0) target = $region41
    $region40: #{tpu_custom_call.1} parent=1 // pred_region
      %102 = vsyncadd [#allocation10], 0
      %s103 = sshll.u32 %s9, 4
      %s104 = int_to_ptr.hbm [resolvable:$true] %s103
      %s105 = sshll.u32 [#allocation11], 4
      %s106 = int_to_ptr.vmem [resolvable:$true] %s105
      %111 = dma.hbm_to_vmem [thread:$0]  %s104, 512, %s106, [#allocation10], 128, 128, 8
    $region41: #{tpu_custom_call.1} parent=1 // pred_fallthru
      _
    // Predicated region
    $region42: #{tpu_custom_call.1} parent=1 // pred_check
      _
    $region43: #{tpu_custom_call.1} parent=1 // pred_check_branch
      %113 = sbr.rel (0) target = $region45
    $region44: #{tpu_custom_call.1} parent=1 // pred_region
      _
    $region45: #{tpu_custom_call.1} parent=1 // pred_fallthru
      _
    // Predicated region
    $region46: #{tpu_custom_call.1} parent=1 // pred_check
      _
    $region47: #{tpu_custom_call.1} parent=1 // pred_check_branch
      %115 = sbr.rel (0) target = $region49
    $region48: #{tpu_custom_call.1} parent=1 // pred_region
      %117 = vsyncadd [#allocation13], 0
      %s118 = sshll.u32 %s11, 4
      %s119 = int_to_ptr.hbm [resolvable:$true] %s118
      %s120 = sshll.u32 [#allocation12], 4
      %s121 = int_to_ptr.vmem [resolvable:$true] %s120
      %126 = dma.hbm_to_vmem [thread:$0]  %s119, 512, %s121, [#allocation13], 128, 128, 8
    $region49: #{tpu_custom_call.1} parent=1 // pred_fallthru
      _
    // Predicated region
    $region50: #{tpu_custom_call.1} parent=1 // pred_check
      _
    $region51: #{tpu_custom_call.1} parent=1 // pred_check_branch
      %128 = sbr.rel (0) target = $region53
    $region52: #{tpu_custom_call.1} parent=1 // pred_region
      %130 = vsyncadd [#allocation13], 0
      %s131 = sshll.u32 %s12, 4
      %s132 = int_to_ptr.hbm [resolvable:$true] %s131
      %s133 = sshll.u32 [#allocation14], 4
      %s134 = int_to_ptr.vmem [resolvable:$true] %s133
      %139 = dma.hbm_to_vmem [thread:$0]  %s132, 256, %s134, [#allocation13], 128, 128, 8
    $region53: #{tpu_custom_call.1} parent=1 // pred_fallthru
      _
    // Predicated region
    $region54: #{tpu_custom_call.1} parent=1 // pred_check
      _
    $region55: #{tpu_custom_call.1} parent=1 // pred_check_branch
      %141 = sbr.rel (0) target = $region57
    $region56: #{tpu_custom_call.1} parent=1 // pred_region
      _
    $region57: #{tpu_custom_call.1} parent=1 // pred_fallthru
      _
    // Predicated region
    $region58: #{tpu_custom_call.1} parent=1 // pred_check
      _
    $region59: #{tpu_custom_call.1} parent=1 // pred_check_branch
      %143 = sbr.rel (0) target = $region61
    $region60: #{tpu_custom_call.1} parent=1 // pred_region
      _
    $region61: #{tpu_custom_call.1} parent=1 // pred_fallthru
      _
    // Predicated region
    $region62: #{tpu_custom_call.1} parent=1 // pred_check
      _
    $region63: #{tpu_custom_call.1} parent=1 // pred_check_branch
      %145 = sbr.rel (0) target = $region65
    $region64: #{tpu_custom_call.1} parent=1 // pred_region
      _
    $region65: #{tpu_custom_call.1} parent=1 // pred_fallthru
      _
    // Predicated region
    $region66: #{tpu_custom_call.1} parent=1 // pred_check
      _
    $region67: #{tpu_custom_call.1} parent=1 // pred_check_branch
      %147 = sbr.rel (0) target = $region69
    $region68: #{tpu_custom_call.1} parent=1 // pred_region
      %149 = vsyncadd [#allocation16], 0
      %s150 = sshll.u32 %s16, 4
      %s151 = int_to_ptr.hbm [resolvable:$true] %s150
      %s152 = sshll.u32 [#allocation15], 4
      %s153 = int_to_ptr.vmem [resolvable:$true] %s152
      %158 = dma.hbm_to_vmem [thread:$0]  %s151, 512, %s153, [#allocation16], 128, 128, 8
    $region69: #{tpu_custom_call.1} parent=1 // pred_fallthru
      _
    // Predicated region
    $region70: #{tpu_custom_call.1} parent=1 // pred_check
      _
    $region71: #{tpu_custom_call.1} parent=1 // pred_check_branch
      %160 = sbr.rel (0) target = $region73
    $region72: #{tpu_custom_call.1} parent=1 // pred_region
      _
    $region73: #{tpu_custom_call.1} parent=1 // pred_fallthru
      _
    // Predicated region
    $region74: #{tpu_custom_call.1} parent=1 // pred_check
      _
    $region75: #{tpu_custom_call.1} parent=1 // pred_check_branch
      %162 = sbr.rel (0) target = $region77
    $region76: #{tpu_custom_call.1} parent=1 // pred_region
      %164 = vsyncadd [#allocation16], 0
      %s165 = sshll.u32 %s18, 4
      %s166 = int_to_ptr.hbm [resolvable:$true] %s165
      %s167 = sshll.u32 [#allocation17], 4
      %s168 = int_to_ptr.vmem [resolvable:$true] %s167
      %173 = dma.hbm_to_vmem [thread:$0]  %s166, 512, %s168, [#allocation16], 128, 128, 8
    $region77: #{tpu_custom_call.1} parent=1 // pred_fallthru
      _
    // Predicated region
    $region78: #{tpu_custom_call.1} parent=1 // pred_check
      _
    $region79: #{tpu_custom_call.1} parent=1 // pred_check_branch
      %175 = sbr.rel (0) target = $region81
    $region80: #{tpu_custom_call.1} parent=1 // pred_region
      %177 = vsyncadd [#allocation19], 0
      %s178 = sshll.u32 %s19, 4
      %s179 = int_to_ptr.hbm [resolvable:$true] %s178
      %s180 = sshll.u32 [#allocation18], 4
      %s181 = int_to_ptr.vmem [resolvable:$true] %s180
      %186 = dma.hbm_to_vmem [thread:$0]  %s179, 512, %s181, [#allocation19], 128, 128, 8
    $region81: #{tpu_custom_call.1} parent=1 // pred_fallthru
      _
    // Predicated region
    $region82: #{tpu_custom_call.1} parent=1 // pred_check
      _
    $region83: #{tpu_custom_call.1} parent=1 // pred_check_branch
      %188 = sbr.rel (0) target = $region85
    $region84: #{tpu_custom_call.1} parent=1 // pred_region
      _
    $region85: #{tpu_custom_call.1} parent=1 // pred_fallthru
      _
    // Predicated region
    $region86: #{tpu_custom_call.1} parent=1 // pred_check
      _
    $region87: #{tpu_custom_call.1} parent=1 // pred_check_branch
      %190 = sbr.rel (0) target = $region89
    $region88: #{tpu_custom_call.1} parent=1 // pred_region
      _
    $region89: #{tpu_custom_call.1} parent=1 // pred_fallthru
      _
    // Predicated region
    $region90: #{tpu_custom_call.1} parent=1 // pred_check
      _
    $region91: #{tpu_custom_call.1} parent=1 // pred_check_branch
      %192 = sbr.rel (0) target = $region93
    $region92: #{tpu_custom_call.1} parent=1 // pred_region
      _
    $region93: #{tpu_custom_call.1} parent=1 // pred_fallthru
      _
    // Predicated region
    $region94: #{tpu_custom_call.1} parent=1 // pred_check
      _
    $region95: #{tpu_custom_call.1} parent=1 // pred_check_branch
      %194 = sbr.rel (0) target = $region97
    $region96: #{tpu_custom_call.1} parent=1 // pred_region
      _
    $region97: #{tpu_custom_call.1} parent=1 // pred_fallthru
      _
    // Predicated region
    $region98: #{tpu_custom_call.1} parent=1 // pred_check
      _
    $region99: #{tpu_custom_call.1} parent=1 // pred_check_branch
      %196 = sbr.rel (0) target = $region101
    $region100: #{tpu_custom_call.1} parent=1 // pred_region
      %198 = dma.done [#allocation5], 512
    $region101: #{tpu_custom_call.1} parent=1 // pred_fallthru
      _
    // Predicated region
    $region102: #{tpu_custom_call.1} parent=1 // pred_check
      _
    $region103: #{tpu_custom_call.1} parent=1 // pred_check_branch
      %200 = sbr.rel (0) target = $region105
    $region104: #{tpu_custom_call.1} parent=1 // pred_region
      %202 = dma.done [#allocation7], 256
    $region105: #{tpu_custom_call.1} parent=1 // pred_fallthru
      _
    // Predicated region
    $region106: #{tpu_custom_call.1} parent=1 // pred_check
      _
    $region107: #{tpu_custom_call.1} parent=1 // pred_check_branch
      %204 = sbr.rel (0) target = $region109
    $region108: #{tpu_custom_call.1} parent=1 // pred_region
      %206 = dma.done [#allocation7], 512
    $region109: #{tpu_custom_call.1} parent=1 // pred_fallthru
      _
    // Predicated region
    $region110: #{tpu_custom_call.1} parent=1 // pred_check
      _
    $region111: #{tpu_custom_call.1} parent=1 // pred_check_branch
      %208 = sbr.rel (0) target = $region113
    $region112: #{tpu_custom_call.1} parent=1 // pred_region
      %210 = dma.done [#allocation10], 512
    $region113: #{tpu_custom_call.1} parent=1 // pred_fallthru
      _
    // Predicated region
    $region114: #{tpu_custom_call.1} parent=1 // pred_check
      _
    $region115: #{tpu_custom_call.1} parent=1 // pred_check_branch
      %212 = sbr.rel (0) target = $region117
    $region116: #{tpu_custom_call.1} parent=1 // pred_region
      %214 = dma.done [#allocation10], 512
    $region117: #{tpu_custom_call.1} parent=1 // pred_fallthru
      _
    // Predicated region
    $region118: #{tpu_custom_call.1} parent=1 // pred_check
      _
    $region119: #{tpu_custom_call.1} parent=1 // pred_check_branch
      %216 = sbr.rel (0) target = $region121
    $region120: #{tpu_custom_call.1} parent=1 // pred_region
      %218 = dma.done [#allocation13], 512
    $region121: #{tpu_custom_call.1} parent=1 // pred_fallthru
      _
    // Predicated region
    $region122: #{tpu_custom_call.1} parent=1 // pred_check
      _
    $region123: #{tpu_custom_call.1} parent=1 // pred_check_branch
      %220 = sbr.rel (0) target = $region125
    $region124: #{tpu_custom_call.1} parent=1 // pred_region
      %222 = dma.done [#allocation13], 256
    $region125: #{tpu_custom_call.1} parent=1 // pred_fallthru
      _
    // Predicated region
    $region126: #{tpu_custom_call.1} parent=1 // pred_check
      _
    $region127: #{tpu_custom_call.1} parent=1 // pred_check_branch
      %224 = sbr.rel (0) target = $region129
    $region128: #{tpu_custom_call.1} parent=1 // pred_region
      %226 = dma.done [#allocation16], 512
    $region129: #{tpu_custom_call.1} parent=1 // pred_fallthru
      _
    // Predicated region
    $region130: #{tpu_custom_call.1} parent=1 // pred_check
      _
    $region131: #{tpu_custom_call.1} parent=1 // pred_check_branch
      %228 = sbr.rel (0) target = $region133
    $region132: #{tpu_custom_call.1} parent=1 // pred_region
      %230 = dma.done [#allocation16], 512
    $region133: #{tpu_custom_call.1} parent=1 // pred_fallthru
      _
    // Predicated region
    $region134: #{tpu_custom_call.1} parent=1 // pred_check
      _
    $region135: #{tpu_custom_call.1} parent=1 // pred_check_branch
      %232 = sbr.rel (0) target = $region137
    $region136: #{tpu_custom_call.1} parent=1 // pred_region
      %234 = dma.done [#allocation19], 512
    $region137: #{tpu_custom_call.1} parent=1 // pred_fallthru
      _
    %vm235 = vcmask 261120
    %236 = vst.msk [vmem:[#allocation2] sm:$0xff] %vm235, 0.0
    %237 = vst.msk [vmem:[#allocation2 + $0x8] sm:$0xff] %vm235, 0.0
    %238 = vst.msk [vmem:[#allocation2 + $0x10] sm:$0xff] %vm235, 0.0
    %239 = vst.msk [vmem:[#allocation2 + $0x18] sm:$0xff] %vm235, 0.0
    %v240 = vlaneseq
    %v241 = vand.u32 %v240, 127
    %v242 = vld [vmem:[#allocation14] sm:$0xff]
    %v243 = vld [vmem:[#allocation14 + $0x8] sm:$0xff]
    %v244 = vld [vmem:[%s15] sm:$0xff]
    %v245 = vld [vmem:[%s15 + $0x8] sm:$0xff]
    %v246 = vld [vmem:[%s22] sm:$0x1]
    %v247 = vld [vmem:[#allocation3] sm:$0x1]
    %s248 = vtos %v247
    loop: start=0, step=1, limit=8
    $region138: #{tpu_custom_call.1} parent=1 // loop_pre_header
      _
    $region139: #{tpu_custom_call.1} parent=1 // loop_header
      %s250 = sphi 0, %s254
      %p251 = scmp.ge.s32.totalorder %s250, 8
    $region140: #{tpu_custom_call.1} parent=1 // loop_header_branch
      %253 = sbr.rel (%p251) target = $region144
    $region141: #{tpu_custom_call.1} parent=1 // loop_body
      %s255 = smul.u32 %s250, 2
      %s256 = scalar_lea.vmem %s0, %s255
      %v257 = vld [vmem:[%s256] sm:$0x3]
      %s258 = scalar_lea.vmem %s1, %s255
      %v259 = vld [vmem:[%s258] sm:$0x3]
      %s260 = scalar_lea.vmem %s2, %s255
      %v261 = vld [vmem:[%s260] sm:$0x3]
      %v262 = vld [vmem:[#allocation2] sm:$0xff]
      %v263 = vld [vmem:[#allocation2 + $0x8] sm:$0xff]
      %v264 = vld [vmem:[#allocation2 + $0x10] sm:$0xff]
      %v265 = vld [vmem:[#allocation2 + $0x18] sm:$0xff]
      %266 = vset.pattern.permute.xlu0 0
      %267 = vperm.xlu0 %266, %v257
      %v268 = vpop.permute.xlu0 %267
      %vm269 = vcmp.eq.s32.totalorder %v241, %v268
      %v270 = vsel %vm269, 1, 0
      %v271 = vcvt.s32.f32 %v270
      %272 = vset.pattern.permute.xlu0 0
      %273 = vperm.xlu0 %272, %v259
      %v274 = vpop.permute.xlu0 %273
      %vm275 = vcmp.eq.s32.totalorder %v241, %v274
      %v276 = vsel %vm275, 1, 0
      %v277 = vcvt.s32.f32 %v276
      %278 = vset.pattern.permute.xlu0 0
      %279 = vperm.xlu0 %278, %v261
      %v280 = vpop.permute.xlu0 %279
      %vm281 = vcmp.eq.s32.totalorder %v241, %v280
      %v282 = vsel %vm281, 1, 0
      %v283 = vcvt.s32.f32 %v282
      %v284 = vld [vmem:[#allocation4] sm:$0xff]
      %v285 = vld [vmem:[#allocation4 + $0x8] sm:$0xff]
      %v286 = vld [vmem:[#allocation4 + $0x10] sm:$0xff]
      %v287 = vld [vmem:[#allocation4 + $0x18] sm:$0xff]
      %v289 = vsel %vm235, %v271, 0
      %291 = vmatpush.msra.mxu0 0.0
      %292 = vmatpush.msra.mxu0 0.0
      %293 = vmatpush.msra.mxu0 0.0
      %294 = vmatpush.msra.mxu0 0.0
      %295 = vmatpush.msra.mxu0 0.0
      %296 = vmatpush.msra.mxu0 0.0
      %297 = vmatpush.msra.mxu0 0.0
      %298 = vmatpush.msra.mxu0 0.0
      %299 = vmatpush.msra.mxu0 0.0
      %300 = vmatpush.msra.mxu0 0.0
      %301 = vmatpush.msra.mxu0 0.0
      %302 = vmatpush.msra.mxu0 0.0
      %303 = vmatpush.msra.mxu0 %v287
      %304 = vmatpush.msra.mxu0 %v286
      %305 = vmatpush.msra.mxu0 %v285
      %306 = vmatpush.msra.mxu0 %v284
      %307 = vmatmul.f32.gmra.mxu0 %v289
      %v308 = vpop.f32.mrf.mxu0
      %v309 = vadd.f32 0.0, %v308
      %310 = vdwg.mxu0
      %v311 = vld [vmem:[%s4] sm:$0xff]
      %v312 = vld [vmem:[%s4 + $0x8] sm:$0xff]
      %vm313 = vcmask 130048
      %v315 = vsel %vm313, %v277, 0
      %317 = vmatpush.msra.mxu0 0.0
      %318 = vmatpush.msra.mxu0 0.0
      %319 = vmatpush.msra.mxu0 0.0
      %320 = vmatpush.msra.mxu0 0.0
      %321 = vmatpush.msra.mxu0 0.0
      %322 = vmatpush.msra.mxu0 0.0
      %323 = vmatpush.msra.mxu0 0.0
      %324 = vmatpush.msra.mxu0 0.0
      %325 = vmatpush.msra.mxu0 0.0
      %326 = vmatpush.msra.mxu0 0.0
      %327 = vmatpush.msra.mxu0 0.0
      %328 = vmatpush.msra.mxu0 0.0
      %329 = vmatpush.msra.mxu0 0.0
      %330 = vmatpush.msra.mxu0 0.0
      %331 = vmatpush.msra.mxu0 %v312
      %332 = vmatpush.msra.mxu0 %v311
      %333 = vmatmul.f32.gmra.mxu0 %v315
      %v334 = vpop.f32.mrf.mxu0
      %v335 = vadd.f32 0.0, %v334
      %336 = vdwg.mxu0
      %v337 = vld [vmem:[#allocation6] sm:$0xff]
      %v338 = vld [vmem:[#allocation6 + $0x8] sm:$0xff]
      %339 = vmatpush.msra.mxu0 0.0
      %340 = vmatpush.msra.mxu0 0.0
      %341 = vmatpush.msra.mxu0 0.0
      %342 = vmatpush.msra.mxu0 0.0
      %343 = vmatpush.msra.mxu0 0.0
      %344 = vmatpush.msra.mxu0 0.0
      %345 = vmatpush.msra.mxu0 0.0
      %346 = vmatpush.msra.mxu0 0.0
      %347 = vmatpush.msra.mxu0 0.0
      %348 = vmatpush.msra.mxu0 0.0
      %349 = vmatpush.msra.mxu0 0.0
      %350 = vmatpush.msra.mxu0 0.0
      %351 = vmatpush.msra.mxu0 0.0
      %352 = vmatpush.msra.mxu0 0.0
      %353 = vmatpush.msra.mxu0 %v338
      %354 = vmatpush.msra.mxu0 %v337
      %355 = vmatmul.f32.gmra.mxu0 %v315
      %v356 = vpop.f32.mrf.mxu0
      %v357 = vadd.f32 0.0, %v356
      %358 = vdwg.mxu0
      %v359 = vperm.slane %v277, 0
      %v360 = vlaneseq
      %v361 = vshrl.u32 %v360, 7
      %363 = vset.pattern.permute.xlu0 %v361
      %364 = vperm.xlu0 %363, %v359
      %v365 = vpop.permute.xlu0 %364
      %v366 = vlaneseq
      %v367 = vshrl.u32 %v366, 7
      %v368 = vadd.s32 %v367, 8
      %369 = vset.pattern.permute.xlu0 %v368
      %370 = vperm.xlu0 %369, %v359
      %v371 = vpop.permute.xlu0 %370
      %v372 = vperm.slane %v277, 1
      %v373 = vlaneseq
      %v374 = vshrl.u32 %v373, 7
      %376 = vset.pattern.permute.xlu0 %v374
      %377 = vperm.xlu0 %376, %v372
      %v378 = vpop.permute.xlu0 %377
      %v379 = vlaneseq
      %v380 = vshrl.u32 %v379, 7
      %v381 = vadd.s32 %v380, 8
      %382 = vset.pattern.permute.xlu0 %v381
      %383 = vperm.xlu0 %382, %v372
      %v384 = vpop.permute.xlu0 %383
      %v385 = vmul.f32 %v365, %v262
      %v386 = vmul.f32 %v371, %v263
      %v387 = vmul.f32 %v378, %v264
      %v388 = vmul.f32 %v384, %v265
      %v389 = vsel %vm235, %v385, 0.0
      %v390 = vsel %vm235, %v386, 0.0
      %v391 = vadd.f32 %v389, %v390
      %v392 = vrot.slane %v391, 4
      %v393 = vadd.f32 %v391, %v392
      %v394 = vrot.slane %v393, 2
      %v395 = vadd.f32 %v393, %v394
      %v396 = vrot.slane %v395, 1
      %v397 = vadd.f32 %v395, %v396
      %v398 = vsel %vm235, %v387, 0.0
      %v399 = vsel %vm235, %v388, 0.0
      %v400 = vadd.f32 %v398, %v399
      %v401 = vrot.slane %v400, 4
      %v402 = vadd.f32 %v400, %v401
      %v403 = vrot.slane %v402, 2
      %v404 = vadd.f32 %v402, %v403
      %v405 = vrot.slane %v404, 1
      %v406 = vadd.f32 %v404, %v405
      %v407 = vld [vmem:[#allocation8] sm:$0xff]
      %v408 = vld [vmem:[#allocation8 + $0x8] sm:$0xff]
      %v409 = vld [vmem:[#allocation8 + $0x10] sm:$0xff]
      %v410 = vld [vmem:[#allocation8 + $0x18] sm:$0xff]
      %v411 = vld [vmem:[#allocation9] sm:$0xff]
      %v412 = vld [vmem:[#allocation9 + $0x8] sm:$0xff]
      %v413 = vld [vmem:[#allocation9 + $0x10] sm:$0xff]
      %v414 = vld [vmem:[#allocation9 + $0x18] sm:$0xff]
      %v416 = vsel %vm235, %v309, 0
      %418 = vmatpush.msra.mxu0 0.0
      %419 = vmatpush.msra.mxu0 0.0
      %420 = vmatpush.msra.mxu0 0.0
      %421 = vmatpush.msra.mxu0 0.0
      %422 = vmatpush.msra.mxu0 0.0
      %423 = vmatpush.msra.mxu0 0.0
      %424 = vmatpush.msra.mxu0 0.0
      %425 = vmatpush.msra.mxu0 0.0
      %426 = vmatpush.msra.mxu0 0.0
      %427 = vmatpush.msra.mxu0 0.0
      %428 = vmatpush.msra.mxu0 0.0
      %429 = vmatpush.msra.mxu0 0.0
      %430 = vmatpush.msra.mxu0 %v414
      %431 = vmatpush.msra.mxu0 %v413
      %432 = vmatpush.msra.mxu0 %v412
      %433 = vmatpush.msra.mxu0 %v411
      %434 = vmatmul.f32.gmra.mxu0 %v416
      %v435 = vpop.f32.mrf.mxu0
      %v436 = vadd.f32 0.0, %v435
      %437 = vdwg.mxu0
      %vm440 = vcmask 1041409
      %v441 = vsel %vm440, %v406, %v397
      %v442 = vsel %vm235, %v441, 0
      %444 = vmatpush.msra.mxu0 0.0
      %445 = vmatpush.msra.mxu0 0.0
      %446 = vmatpush.msra.mxu0 0.0
      %447 = vmatpush.msra.mxu0 0.0
      %448 = vmatpush.msra.mxu0 0.0
      %449 = vmatpush.msra.mxu0 0.0
      %450 = vmatpush.msra.mxu0 0.0
      %451 = vmatpush.msra.mxu0 0.0
      %452 = vmatpush.msra.mxu0 0.0
      %453 = vmatpush.msra.mxu0 0.0
      %454 = vmatpush.msra.mxu0 0.0
      %455 = vmatpush.msra.mxu0 0.0
      %456 = vmatpush.msra.mxu0 %v410
      %457 = vmatpush.msra.mxu0 %v409
      %458 = vmatpush.msra.mxu0 %v408
      %459 = vmatpush.msra.mxu0 %v407
      %460 = vmatmul.f32.gmra.mxu0 %v442
      %v461 = vpop.f32.mrf.mxu0
      %v462 = vadd.f32 %v436, %v461
      %463 = vdwg.mxu0
      %v464 = vld [vmem:[%s8] sm:$0x1]
      %v466 = vperm.slane %v464, 0
      %v468 = vadd.f32 %v462, %v466
      %v469 = vmax.f32 %v468, 0.0
      %v470 = vld [vmem:[#allocation11] sm:$0xff]
      %v471 = vld [vmem:[#allocation11 + $0x8] sm:$0xff]
      %v472 = vld [vmem:[#allocation11 + $0x10] sm:$0xff]
      %v473 = vld [vmem:[#allocation11 + $0x18] sm:$0xff]
      %v474 = vld [vmem:[%s10] sm:$0x1]
      %v476 = vperm.slane %v474, 0
      %v479 = vsel %vm235, %v469, 0
      %481 = vmatpush.msra.mxu0 0.0
      %482 = vmatpush.msra.mxu0 0.0
      %483 = vmatpush.msra.mxu0 0.0
      %484 = vmatpush.msra.mxu0 0.0
      %485 = vmatpush.msra.mxu0 0.0
      %486 = vmatpush.msra.mxu0 0.0
      %487 = vmatpush.msra.mxu0 0.0
      %488 = vmatpush.msra.mxu0 0.0
      %489 = vmatpush.msra.mxu0 0.0
      %490 = vmatpush.msra.mxu0 0.0
      %491 = vmatpush.msra.mxu0 0.0
      %492 = vmatpush.msra.mxu0 0.0
      %493 = vmatpush.msra.mxu0 %v473
      %494 = vmatpush.msra.mxu0 %v472
      %495 = vmatpush.msra.mxu0 %v471
      %496 = vmatpush.msra.mxu0 %v470
      %497 = vmatmul.f32.gmra.mxu0 %v479
      %v498 = vpop.f32.mrf.mxu0
      %v499 = vadd.f32 %v476, %v498
      %500 = vdwg.mxu0
      %v501 = vmax.f32 %v499, 0.0
      %v502 = vld [vmem:[#allocation12] sm:$0xff]
      %v503 = vld [vmem:[#allocation12 + $0x8] sm:$0xff]
      %v504 = vld [vmem:[#allocation12 + $0x10] sm:$0xff]
      %v505 = vld [vmem:[#allocation12 + $0x18] sm:$0xff]
      %v507 = vsel %vm235, %v262, 0
      %v510 = vsel %vm235, %v263, 0
      %v513 = vsel %vm235, %v264, 0
      %v516 = vsel %vm235, %v265, 0
      %518 = vmatpush.msra.mxu0 0.0
      %519 = vmatpush.msra.mxu0 0.0
      %520 = vmatpush.msra.mxu0 0.0
      %521 = vmatpush.msra.mxu0 0.0
      %522 = vmatpush.msra.mxu0 0.0
      %523 = vmatpush.msra.mxu0 0.0
      %524 = vmatpush.msra.mxu0 0.0
      %525 = vmatpush.msra.mxu0 0.0
      %526 = vmatpush.msra.mxu0 0.0
      %527 = vmatpush.msra.mxu0 0.0
      %528 = vmatpush.msra.mxu0 0.0
      %529 = vmatpush.msra.mxu0 0.0
      %530 = vmatpush.msra.mxu0 %v505
      %531 = vmatpush.msra.mxu0 %v504
      %532 = vmatpush.msra.mxu0 %v503
      %533 = vmatpush.msra.mxu0 %v502
      %534 = vmatmul.f32.gmra.mxu0 %v507
      %v535 = vpop.f32.mrf.mxu0
      %v536 = vadd.f32 0.0, %v535
      %537 = vmatmul.f32.gmra.mxu0 %v510
      %v538 = vpop.f32.mrf.mxu0
      %v539 = vadd.f32 0.0, %v538
      %540 = vmatmul.f32.gmra.mxu0 %v513
      %v541 = vpop.f32.mrf.mxu0
      %v542 = vadd.f32 0.0, %v541
      %543 = vmatmul.f32.gmra.mxu0 %v516
      %v544 = vpop.f32.mrf.mxu0
      %v545 = vadd.f32 0.0, %v544
      %546 = vdwg.mxu0
      %v548 = vrot.slane %v468, 1
      %v549 = vperm.slane %v468, 0
      %v550 = vperm.slane %v548, 0
      %551 = vrot.lane.b32.xlu0 %v549, 96
      %v552 = vpop.permute.xlu0 %551
      %553 = vrot.lane.b32.xlu0 %v550, 96
      %v554 = vpop.permute.xlu0 %553
      %v557 = vadd.f32 %v536, %v552
      %v558 = vadd.f32 %v539, %v552
      %v559 = vadd.f32 %v542, %v554
      %v560 = vadd.f32 %v545, %v554
      %v561 = vadd.f32 %v557, %v242
      %v562 = vadd.f32 %v558, %v243
      %v563 = vadd.f32 %v559, %v242
      %v564 = vadd.f32 %v560, %v243
      %v565 = vmax.f32 %v561, 0.0
      %v566 = vmax.f32 %v562, 0.0
      %v567 = vmax.f32 %v563, 0.0
      %v568 = vmax.f32 %v564, 0.0
      %v569 = vld [vmem:[%s13] sm:$0xff]
      %v570 = vld [vmem:[%s13 + $0x8] sm:$0xff]
      %v571 = vld [vmem:[%s13 + $0x10] sm:$0xff]
      %v572 = vld [vmem:[%s13 + $0x18] sm:$0xff]
      %v573 = vld [vmem:[%s13 + $0x20] sm:$0xff]
      %v574 = vld [vmem:[%s13 + $0x28] sm:$0xff]
      %v575 = vld [vmem:[%s13 + $0x30] sm:$0xff]
      %v576 = vld [vmem:[%s13 + $0x38] sm:$0xff]
      %v577 = vld [vmem:[%s14] sm:$0x1]
      %v579 = vperm.slane %v577, 0
      %vm581 = vcmask 523264
      %v583 = vsel %vm581, %v565, 0
      %v586 = vsel %vm581, %v566, 0
      %v589 = vsel %vm581, %v567, 0
      %v592 = vsel %vm581, %v568, 0
      %594 = vmatpush.msra.mxu0 0.0
      %595 = vmatpush.msra.mxu0 0.0
      %596 = vmatpush.msra.mxu0 0.0
      %597 = vmatpush.msra.mxu0 0.0
      %598 = vmatpush.msra.mxu0 0.0
      %599 = vmatpush.msra.mxu0 0.0
      %600 = vmatpush.msra.mxu0 0.0
      %601 = vmatpush.msra.mxu0 0.0
      %602 = vmatpush.msra.mxu0 %v576
      %603 = vmatpush.msra.mxu0 %v575
      %604 = vmatpush.msra.mxu0 %v574
      %605 = vmatpush.msra.mxu0 %v573
      %606 = vmatpush.msra.mxu0 %v572
      %607 = vmatpush.msra.mxu0 %v571
      %608 = vmatpush.msra.mxu0 %v570
      %609 = vmatpush.msra.mxu0 %v569
      %610 = vmatmul.f32.gmra.mxu0 %v583
      %v611 = vpop.f32.mrf.mxu0
      %v612 = vadd.f32 %v579, %v611
      %613 = vmatmul.f32.gmra.mxu0 %v586
      %v614 = vpop.f32.mrf.mxu0
      %v615 = vadd.f32 %v579, %v614
      %616 = vmatmul.f32.gmra.mxu0 %v589
      %v617 = vpop.f32.mrf.mxu0
      %v618 = vadd.f32 %v579, %v617
      %619 = vmatmul.f32.gmra.mxu0 %v592
      %v620 = vpop.f32.mrf.mxu0
      %v621 = vadd.f32 %v579, %v620
      %622 = vdwg.mxu0
      %v623 = vmax.f32 %v612, 0.0
      %v624 = vmax.f32 %v615, 0.0
      %v625 = vmax.f32 %v618, 0.0
      %v626 = vmax.f32 %v621, 0.0
      %v627 = vperm.slane %v335, 0
      %v628 = vlaneseq
      %v629 = vshrl.u32 %v628, 7
      %631 = vset.pattern.permute.xlu0 %v629
      %632 = vperm.xlu0 %631, %v627
      %v633 = vpop.permute.xlu0 %632
      %v634 = vlaneseq
      %v635 = vshrl.u32 %v634, 7
      %v636 = vadd.s32 %v635, 8
      %637 = vset.pattern.permute.xlu0 %v636
      %638 = vperm.xlu0 %637, %v627
      %v639 = vpop.permute.xlu0 %638
      %v640 = vperm.slane %v335, 1
      %v641 = vlaneseq
      %v642 = vshrl.u32 %v641, 7
      %644 = vset.pattern.permute.xlu0 %v642
      %645 = vperm.xlu0 %644, %v640
      %v646 = vpop.permute.xlu0 %645
      %v647 = vlaneseq
      %v648 = vshrl.u32 %v647, 7
      %v649 = vadd.s32 %v648, 8
      %650 = vset.pattern.permute.xlu0 %v649
      %651 = vperm.xlu0 %650, %v640
      %v652 = vpop.permute.xlu0 %651
      %v653 = vmul.f32 %v633, %v623
      %v654 = vmul.f32 %v639, %v624
      %v655 = vmul.f32 %v646, %v625
      %v656 = vmul.f32 %v652, %v626
      %v657 = vperm.slane %v357, 0
      %v658 = vlaneseq
      %v659 = vshrl.u32 %v658, 7
      %661 = vset.pattern.permute.xlu0 %v659
      %662 = vperm.xlu0 %661, %v657
      %v663 = vpop.permute.xlu0 %662
      %v664 = vlaneseq
      %v665 = vshrl.u32 %v664, 7
      %v666 = vadd.s32 %v665, 8
      %667 = vset.pattern.permute.xlu0 %v666
      %668 = vperm.xlu0 %667, %v657
      %v669 = vpop.permute.xlu0 %668
      %v670 = vperm.slane %v357, 1
      %v671 = vlaneseq
      %v672 = vshrl.u32 %v671, 7
      %674 = vset.pattern.permute.xlu0 %v672
      %675 = vperm.xlu0 %674, %v670
      %v676 = vpop.permute.xlu0 %675
      %v677 = vlaneseq
      %v678 = vshrl.u32 %v677, 7
      %v679 = vadd.s32 %v678, 8
      %680 = vset.pattern.permute.xlu0 %v679
      %681 = vperm.xlu0 %680, %v670
      %v682 = vpop.permute.xlu0 %681
      %v683 = vmul.f32 %v663, %v623
      %v684 = vmul.f32 %v669, %v624
      %v685 = vmul.f32 %v676, %v625
      %v686 = vmul.f32 %v682, %v626
      %691 = vrot.lane.b32.xlu0 %v683, 96
      %v692 = vpop.permute.xlu0 %691
      %693 = vrot.lane.b32.xlu0 %v684, 96
      %v694 = vpop.permute.xlu0 %693
      %695 = vrot.lane.b32.xlu0 %v685, 96
      %v696 = vpop.permute.xlu0 %695
      %697 = vrot.lane.b32.xlu0 %v686, 96
      %v698 = vpop.permute.xlu0 %697
      %v703 = vadd.f32 %v653, %v692
      %v704 = vadd.f32 %v654, %v694
      %v705 = vadd.f32 %v655, %v696
      %v706 = vadd.f32 %v656, %v698
      %v708 = vrot.slane %v501, 1
      %v709 = vperm.slane %v501, 0
      %v710 = vperm.slane %v708, 0
      %v713 = vmul.f32 %v365, %v709
      %v714 = vmul.f32 %v371, %v709
      %v715 = vmul.f32 %v378, %v710
      %v716 = vmul.f32 %v384, %v710
      %v717 = vsub.f32 1.0, %v365
      %v718 = vsub.f32 1.0, %v371
      %v719 = vsub.f32 1.0, %v378
      %v720 = vsub.f32 1.0, %v384
      %v721 = vmul.f32 %v717, %v703
      %v722 = vmul.f32 %v718, %v704
      %v723 = vmul.f32 %v719, %v705
      %v724 = vmul.f32 %v720, %v706
      %v725 = vadd.f32 %v713, %v721
      %v726 = vadd.f32 %v714, %v722
      %v727 = vadd.f32 %v715, %v723
      %v728 = vadd.f32 %v716, %v724
      %v729 = vld [vmem:[#allocation15] sm:$0xff]
      %v730 = vld [vmem:[#allocation15 + $0x8] sm:$0xff]
      %v731 = vld [vmem:[#allocation15 + $0x10] sm:$0xff]
      %v732 = vld [vmem:[#allocation15 + $0x18] sm:$0xff]
      %v733 = vld [vmem:[%s17] sm:$0x1]
      %v735 = vperm.slane %v733, 0
      %v738 = vsel %vm235, %v725, 0
      %v741 = vsel %vm235, %v726, 0
      %v744 = vsel %vm235, %v727, 0
      %v747 = vsel %vm235, %v728, 0
      %749 = vmatpush.msra.mxu0 0.0
      %750 = vmatpush.msra.mxu0 0.0
      %751 = vmatpush.msra.mxu0 0.0
      %752 = vmatpush.msra.mxu0 0.0
      %753 = vmatpush.msra.mxu0 0.0
      %754 = vmatpush.msra.mxu0 0.0
      %755 = vmatpush.msra.mxu0 0.0
      %756 = vmatpush.msra.mxu0 0.0
      %757 = vmatpush.msra.mxu0 0.0
      %758 = vmatpush.msra.mxu0 0.0
      %759 = vmatpush.msra.mxu0 0.0
      %760 = vmatpush.msra.mxu0 0.0
      %761 = vmatpush.msra.mxu0 %v732
      %762 = vmatpush.msra.mxu0 %v731
      %763 = vmatpush.msra.mxu0 %v730
      %764 = vmatpush.msra.mxu0 %v729
      %765 = vmatmul.f32.gmra.mxu0 %v738
      %v766 = vpop.f32.mrf.mxu0
      %v767 = vadd.f32 %v735, %v766
      %768 = vmatmul.f32.gmra.mxu0 %v741
      %v769 = vpop.f32.mrf.mxu0
      %v770 = vadd.f32 %v735, %v769
      %771 = vmatmul.f32.gmra.mxu0 %v744
      %v772 = vpop.f32.mrf.mxu0
      %v773 = vadd.f32 %v735, %v772
      %774 = vmatmul.f32.gmra.mxu0 %v747
      %v775 = vpop.f32.mrf.mxu0
      %v776 = vadd.f32 %v735, %v775
      %777 = vdwg.mxu0
      %v778 = vsub.f32 0.0, %v767
      %v779 = vsub.f32 0.0, %v770
      %v780 = vsub.f32 0.0, %v773
      %v781 = vsub.f32 0.0, %v776
      %v782 = vmul.f32 %v778, 1.442695
      %v783 = vpow.pop %v782
      %v784 = vmul.f32 %v779, 1.442695
      %v785 = vpow.pop %v784
      %v786 = vmul.f32 %v780, 1.442695
      %v787 = vpow.pop %v786
      %v788 = vmul.f32 %v781, 1.442695
      %v789 = vpow.pop %v788
      %v790 = vadd.f32 %v783, 1.0
      %v791 = vadd.f32 %v785, 1.0
      %v792 = vadd.f32 %v787, 1.0
      %v793 = vadd.f32 %v789, 1.0
      %v794 = vrcp.pop %v790
      %v795 = vmul.f32 %v790, %v794
      %v796 = vsub.f32 1.0, %v795
      %v797 = vmul.f32 %v794, %v796
      %v798 = vadd.f32 %v794, %v797
      %vm799 = vweird.f32 %v790
      %vm800 = vweird.f32 %v794
      %vm801 = vmor %vm799, %vm800
      %v802 = vsel %vm801, %v794, %v798
      %v803 = vand.u32 2147483647, %v790
      %vm804 = vcmp.eq.f32.partialorder %v803, 8.507059e+37
      %v805 = vand.u32 %v790, 2147483648
      %v806 = vor.u32 1.1754944e-38, %v805
      %v807 = vsel %vm804, %v806, %v802
      %v808 = vmul.f32 1.0, %v807
      %v809 = vrcp.pop %v791
      %v810 = vmul.f32 %v791, %v809
      %v811 = vsub.f32 1.0, %v810
      %v812 = vmul.f32 %v809, %v811
      %v813 = vadd.f32 %v809, %v812
      %vm814 = vweird.f32 %v791
      %vm815 = vweird.f32 %v809
      %vm816 = vmor %vm814, %vm815
      %v817 = vsel %vm816, %v809, %v813
      %v818 = vand.u32 2147483647, %v791
      %vm819 = vcmp.eq.f32.partialorder %v818, 8.507059e+37
      %v820 = vand.u32 %v791, 2147483648
      %v821 = vor.u32 1.1754944e-38, %v820
      %v822 = vsel %vm819, %v821, %v817
      %v823 = vmul.f32 1.0, %v822
      %v824 = vrcp.pop %v792
      %v825 = vmul.f32 %v792, %v824
      %v826 = vsub.f32 1.0, %v825
      %v827 = vmul.f32 %v824, %v826
      %v828 = vadd.f32 %v824, %v827
      %vm829 = vweird.f32 %v792
      %vm830 = vweird.f32 %v824
      %vm831 = vmor %vm829, %vm830
      %v832 = vsel %vm831, %v824, %v828
      %v833 = vand.u32 2147483647, %v792
      %vm834 = vcmp.eq.f32.partialorder %v833, 8.507059e+37
      %v835 = vand.u32 %v792, 2147483648
      %v836 = vor.u32 1.1754944e-38, %v835
      %v837 = vsel %vm834, %v836, %v832
      %v838 = vmul.f32 1.0, %v837
      %v839 = vrcp.pop %v793
      %v840 = vmul.f32 %v793, %v839
      %v841 = vsub.f32 1.0, %v840
      %v842 = vmul.f32 %v839, %v841
      %v843 = vadd.f32 %v839, %v842
      %vm844 = vweird.f32 %v793
      %vm845 = vweird.f32 %v839
      %vm846 = vmor %vm844, %vm845
      %v847 = vsel %vm846, %v839, %v843
      %v848 = vand.u32 2147483647, %v793
      %vm849 = vcmp.eq.f32.partialorder %v848, 8.507059e+37
      %v850 = vand.u32 %v793, 2147483648
      %v851 = vor.u32 1.1754944e-38, %v850
      %v852 = vsel %vm849, %v851, %v847
      %v853 = vmul.f32 1.0, %v852
      %v854 = vtanh.pop %v767
      %v855 = vtanh.pop %v770
      %v856 = vtanh.pop %v773
      %v857 = vtanh.pop %v776
      %859 = vset.pattern.permute.xlu0 0
      %860 = vperm.xlu0 %859, %v244
      %v861 = vpop.permute.xlu0 %860
      %864 = vset.pattern.permute.xlu0 0
      %865 = vperm.xlu0 %864, %v245
      %v866 = vpop.permute.xlu0 %865
      %v868 = vmul.f32 %v861, %v808
      %v869 = vmul.f32 %v866, %v823
      %v870 = vmul.f32 %v861, %v838
      %v871 = vmul.f32 %v866, %v853
      %v872 = vmul.f32 %v868, %v725
      %v873 = vmul.f32 %v869, %v726
      %v874 = vmul.f32 %v870, %v727
      %v875 = vmul.f32 %v871, %v728
      %v876 = vsub.f32 %v725, %v872
      %v877 = vsub.f32 %v726, %v873
      %v878 = vsub.f32 %v727, %v874
      %v879 = vsub.f32 %v728, %v875
      %v880 = vmul.f32 %v861, %v854
      %v881 = vmul.f32 %v866, %v855
      %v882 = vmul.f32 %v861, %v856
      %v883 = vmul.f32 %v866, %v857
      %888 = vrot.lane.b32.xlu0 %v880, 96
      %v889 = vpop.permute.xlu0 %888
      %890 = vrot.lane.b32.xlu0 %v881, 96
      %v891 = vpop.permute.xlu0 %890
      %892 = vrot.lane.b32.xlu0 %v882, 96
      %v893 = vpop.permute.xlu0 %892
      %894 = vrot.lane.b32.xlu0 %v883, 96
      %v895 = vpop.permute.xlu0 %894
      %v900 = vadd.f32 %v876, %v889
      %v901 = vadd.f32 %v877, %v891
      %v902 = vadd.f32 %v878, %v893
      %v903 = vadd.f32 %v879, %v895
      %v904 = vld [vmem:[#allocation17] sm:$0xff]
      %v905 = vld [vmem:[#allocation17 + $0x8] sm:$0xff]
      %v906 = vld [vmem:[#allocation17 + $0x10] sm:$0xff]
      %v907 = vld [vmem:[#allocation17 + $0x18] sm:$0xff]
      %v908 = vld [vmem:[%s20] sm:$0x1]
      %v910 = vperm.slane %v908, 0
      %v913 = vsel %vm235, %v900, 0
      %v916 = vsel %vm235, %v901, 0
      %v919 = vsel %vm235, %v902, 0
      %v922 = vsel %vm235, %v903, 0
      %924 = vmatpush.msra.mxu0 0.0
      %925 = vmatpush.msra.mxu0 0.0
      %926 = vmatpush.msra.mxu0 0.0
      %927 = vmatpush.msra.mxu0 0.0
      %928 = vmatpush.msra.mxu0 0.0
      %929 = vmatpush.msra.mxu0 0.0
      %930 = vmatpush.msra.mxu0 0.0
      %931 = vmatpush.msra.mxu0 0.0
      %932 = vmatpush.msra.mxu0 0.0
      %933 = vmatpush.msra.mxu0 0.0
      %934 = vmatpush.msra.mxu0 0.0
      %935 = vmatpush.msra.mxu0 0.0
      %936 = vmatpush.msra.mxu0 %v907
      %937 = vmatpush.msra.mxu0 %v906
      %938 = vmatpush.msra.mxu0 %v905
      %939 = vmatpush.msra.mxu0 %v904
      %940 = vmatmul.f32.gmra.mxu0 %v913
      %v941 = vpop.f32.mrf.mxu0
      %v942 = vadd.f32 %v910, %v941
      %943 = vmatmul.f32.gmra.mxu0 %v916
      %v944 = vpop.f32.mrf.mxu0
      %v945 = vadd.f32 %v910, %v944
      %946 = vmatmul.f32.gmra.mxu0 %v919
      %v947 = vpop.f32.mrf.mxu0
      %v948 = vadd.f32 %v910, %v947
      %949 = vmatmul.f32.gmra.mxu0 %v922
      %v950 = vpop.f32.mrf.mxu0
      %v951 = vadd.f32 %v910, %v950
      %952 = vdwg.mxu0
      %v953 = vld [vmem:[#allocation18] sm:$0xff]
      %v954 = vld [vmem:[#allocation18 + $0x8] sm:$0xff]
      %v955 = vld [vmem:[#allocation18 + $0x10] sm:$0xff]
      %v956 = vld [vmem:[#allocation18 + $0x18] sm:$0xff]
      %v957 = vld [vmem:[%s21] sm:$0x1]
      %v959 = vperm.slane %v957, 0
      %961 = vmatpush.msra.mxu0 0.0
      %962 = vmatpush.msra.mxu0 0.0
      %963 = vmatpush.msra.mxu0 0.0
      %964 = vmatpush.msra.mxu0 0.0
      %965 = vmatpush.msra.mxu0 0.0
      %966 = vmatpush.msra.mxu0 0.0
      %967 = vmatpush.msra.mxu0 0.0
      %968 = vmatpush.msra.mxu0 0.0
      %969 = vmatpush.msra.mxu0 0.0
      %970 = vmatpush.msra.mxu0 0.0
      %971 = vmatpush.msra.mxu0 0.0
      %972 = vmatpush.msra.mxu0 0.0
      %973 = vmatpush.msra.mxu0 %v956
      %974 = vmatpush.msra.mxu0 %v955
      %975 = vmatpush.msra.mxu0 %v954
      %976 = vmatpush.msra.mxu0 %v953
      %977 = vmatmul.f32.gmra.mxu0 %v507
      %v978 = vpop.f32.mrf.mxu0
      %v979 = vadd.f32 %v959, %v978
      %980 = vmatmul.f32.gmra.mxu0 %v510
      %v981 = vpop.f32.mrf.mxu0
      %v982 = vadd.f32 %v959, %v981
      %983 = vmatmul.f32.gmra.mxu0 %v513
      %v984 = vpop.f32.mrf.mxu0
      %v985 = vadd.f32 %v959, %v984
      %986 = vmatmul.f32.gmra.mxu0 %v516
      %v987 = vpop.f32.mrf.mxu0
      %v988 = vadd.f32 %v959, %v987
      %989 = vdwg.mxu0
      %v990 = vadd.f32 %v942, %v979
      %v991 = vadd.f32 %v945, %v982
      %v992 = vadd.f32 %v948, %v985
      %v993 = vadd.f32 %v951, %v988
      %v994 = vsub.f32 0.0, %v990
      %v995 = vsub.f32 0.0, %v991
      %v996 = vsub.f32 0.0, %v992
      %v997 = vsub.f32 0.0, %v993
      %v998 = vmul.f32 %v994, 1.442695
      %v999 = vpow.pop %v998
      %v1000 = vmul.f32 %v995, 1.442695
      %v1001 = vpow.pop %v1000
      %v1002 = vmul.f32 %v996, 1.442695
      %v1003 = vpow.pop %v1002
      %v1004 = vmul.f32 %v997, 1.442695
      %v1005 = vpow.pop %v1004
      %v1006 = vadd.f32 %v999, 1.0
      %v1007 = vadd.f32 %v1001, 1.0
      %v1008 = vadd.f32 %v1003, 1.0
      %v1009 = vadd.f32 %v1005, 1.0
      %v1010 = vrcp.pop %v1006
      %v1011 = vmul.f32 %v1006, %v1010
      %v1012 = vsub.f32 1.0, %v1011
      %v1013 = vmul.f32 %v1010, %v1012
      %v1014 = vadd.f32 %v1010, %v1013
      %vm1015 = vweird.f32 %v1006
      %vm1016 = vweird.f32 %v1010
      %vm1017 = vmor %vm1015, %vm1016
      %v1018 = vsel %vm1017, %v1010, %v1014
      %v1019 = vand.u32 2147483647, %v1006
      %vm1020 = vcmp.eq.f32.partialorder %v1019, 8.507059e+37
      %v1021 = vand.u32 %v1006, 2147483648
      %v1022 = vor.u32 1.1754944e-38, %v1021
      %v1023 = vsel %vm1020, %v1022, %v1018
      %v1024 = vmul.f32 1.0, %v1023
      %v1025 = vrcp.pop %v1007
      %v1026 = vmul.f32 %v1007, %v1025
      %v1027 = vsub.f32 1.0, %v1026
      %v1028 = vmul.f32 %v1025, %v1027
      %v1029 = vadd.f32 %v1025, %v1028
      %vm1030 = vweird.f32 %v1007
      %vm1031 = vweird.f32 %v1025
      %vm1032 = vmor %vm1030, %vm1031
      %v1033 = vsel %vm1032, %v1025, %v1029
      %v1034 = vand.u32 2147483647, %v1007
      %vm1035 = vcmp.eq.f32.partialorder %v1034, 8.507059e+37
      %v1036 = vand.u32 %v1007, 2147483648
      %v1037 = vor.u32 1.1754944e-38, %v1036
      %v1038 = vsel %vm1035, %v1037, %v1033
      %v1039 = vmul.f32 1.0, %v1038
      %v1040 = vrcp.pop %v1008
      %v1041 = vmul.f32 %v1008, %v1040
      %v1042 = vsub.f32 1.0, %v1041
      %v1043 = vmul.f32 %v1040, %v1042
      %v1044 = vadd.f32 %v1040, %v1043
      %vm1045 = vweird.f32 %v1008
      %vm1046 = vweird.f32 %v1040
      %vm1047 = vmor %vm1045, %vm1046
      %v1048 = vsel %vm1047, %v1040, %v1044
      %v1049 = vand.u32 2147483647, %v1008
      %vm1050 = vcmp.eq.f32.partialorder %v1049, 8.507059e+37
      %v1051 = vand.u32 %v1008, 2147483648
      %v1052 = vor.u32 1.1754944e-38, %v1051
      %v1053 = vsel %vm1050, %v1052, %v1048
      %v1054 = vmul.f32 1.0, %v1053
      %v1055 = vrcp.pop %v1009
      %v1056 = vmul.f32 %v1009, %v1055
      %v1057 = vsub.f32 1.0, %v1056
      %v1058 = vmul.f32 %v1055, %v1057
      %v1059 = vadd.f32 %v1055, %v1058
      %vm1060 = vweird.f32 %v1009
      %vm1061 = vweird.f32 %v1055
      %vm1062 = vmor %vm1060, %vm1061
      %v1063 = vsel %vm1062, %v1055, %v1059
      %v1064 = vand.u32 2147483647, %v1009
      %vm1065 = vcmp.eq.f32.partialorder %v1064, 8.507059e+37
      %v1066 = vand.u32 %v1009, 2147483648
      %v1067 = vor.u32 1.1754944e-38, %v1066
      %v1068 = vsel %vm1065, %v1067, %v1063
      %v1069 = vmul.f32 1.0, %v1068
      %1074 = vrot.lane.b32.xlu0 %v979, 64
      %v1075 = vpop.permute.xlu0 %1074
      %1076 = vrot.lane.b32.xlu0 %v982, 64
      %v1077 = vpop.permute.xlu0 %1076
      %1078 = vrot.lane.b32.xlu0 %v985, 64
      %v1079 = vpop.permute.xlu0 %1078
      %1080 = vrot.lane.b32.xlu0 %v988, 64
      %v1081 = vpop.permute.xlu0 %1080
      %v1086 = vmul.f32 %v1024, %v1075
      %v1087 = vmul.f32 %v1039, %v1077
      %v1088 = vmul.f32 %v1054, %v1079
      %v1089 = vmul.f32 %v1069, %v1081
      %1094 = vrot.lane.b32.xlu0 %v1086, 64
      %v1095 = vpop.permute.xlu0 %1094
      %1096 = vrot.lane.b32.xlu0 %v1087, 64
      %v1097 = vpop.permute.xlu0 %1096
      %1098 = vrot.lane.b32.xlu0 %v1088, 64
      %v1099 = vpop.permute.xlu0 %1098
      %1100 = vrot.lane.b32.xlu0 %v1089, 64
      %v1101 = vpop.permute.xlu0 %1100
      %v1106 = vadd.f32 %v942, %v1095
      %v1107 = vadd.f32 %v945, %v1097
      %v1108 = vadd.f32 %v948, %v1099
      %v1109 = vadd.f32 %v951, %v1101
      %v1110 = vtanh.pop %v1106
      %v1111 = vtanh.pop %v1107
      %v1112 = vtanh.pop %v1108
      %v1113 = vtanh.pop %v1109
      %v1114 = vsub.f32 1.0, %v1024
      %v1115 = vsub.f32 1.0, %v1039
      %v1116 = vsub.f32 1.0, %v1054
      %v1117 = vsub.f32 1.0, %v1069
      %1122 = vrot.lane.b32.xlu0 %v1110, 96
      %v1123 = vpop.permute.xlu0 %1122
      %1124 = vrot.lane.b32.xlu0 %v1111, 96
      %v1125 = vpop.permute.xlu0 %1124
      %1126 = vrot.lane.b32.xlu0 %v1112, 96
      %v1127 = vpop.permute.xlu0 %1126
      %1128 = vrot.lane.b32.xlu0 %v1113, 96
      %v1129 = vpop.permute.xlu0 %1128
      %v1134 = vmul.f32 %v1114, %v1123
      %v1135 = vmul.f32 %v1115, %v1125
      %v1136 = vmul.f32 %v1116, %v1127
      %v1137 = vmul.f32 %v1117, %v1129
      %1138 = vrot.lane.b32.xlu0 %v262, 32
      %v1139 = vpop.permute.xlu0 %1138
      %1140 = vrot.lane.b32.xlu0 %v263, 32
      %v1141 = vpop.permute.xlu0 %1140
      %1142 = vrot.lane.b32.xlu0 %v264, 32
      %v1143 = vpop.permute.xlu0 %1142
      %1144 = vrot.lane.b32.xlu0 %v265, 32
      %v1145 = vpop.permute.xlu0 %1144
      %v1150 = vmul.f32 %v1024, %v1139
      %v1151 = vmul.f32 %v1039, %v1141
      %v1152 = vmul.f32 %v1054, %v1143
      %v1153 = vmul.f32 %v1069, %v1145
      %v1154 = vadd.f32 %v1134, %v1150
      %v1155 = vadd.f32 %v1135, %v1151
      %v1156 = vadd.f32 %v1136, %v1152
      %v1157 = vadd.f32 %v1137, %v1153
      %1162 = vrot.lane.b32.xlu0 %v1154, 96
      %v1163 = vpop.permute.xlu0 %1162
      %1164 = vrot.lane.b32.xlu0 %v1155, 96
      %v1165 = vpop.permute.xlu0 %1164
      %1166 = vrot.lane.b32.xlu0 %v1156, 96
      %v1167 = vpop.permute.xlu0 %1166
      %1168 = vrot.lane.b32.xlu0 %v1157, 96
      %v1169 = vpop.permute.xlu0 %1168
      %1174 = vst.msk [vmem:[#allocation2] sm:$0xff] %vm235, %v1163
      %1175 = vst.msk [vmem:[#allocation2 + $0x8] sm:$0xff] %vm235, %v1165
      %1176 = vst.msk [vmem:[#allocation2 + $0x10] sm:$0xff] %vm235, %v1167
      %1177 = vst.msk [vmem:[#allocation2 + $0x18] sm:$0xff] %vm235, %v1169
      %v1178 = vperm.slane %v283, 0
      %v1179 = vlaneseq
      %v1180 = vshrl.u32 %v1179, 7
      %1182 = vset.pattern.permute.xlu0 %v1180
      %1183 = vperm.xlu0 %1182, %v1178
      %v1184 = vpop.permute.xlu0 %1183
      %v1185 = vlaneseq
      %v1186 = vshrl.u32 %v1185, 7
      %v1187 = vadd.s32 %v1186, 8
      %1188 = vset.pattern.permute.xlu0 %v1187
      %1189 = vperm.xlu0 %1188, %v1178
      %v1190 = vpop.permute.xlu0 %1189
      %v1191 = vperm.slane %v283, 1
      %v1192 = vlaneseq
      %v1193 = vshrl.u32 %v1192, 7
      %1195 = vset.pattern.permute.xlu0 %v1193
      %1196 = vperm.xlu0 %1195, %v1191
      %v1197 = vpop.permute.xlu0 %1196
      %v1198 = vlaneseq
      %v1199 = vshrl.u32 %v1198, 7
      %v1200 = vadd.s32 %v1199, 8
      %1201 = vset.pattern.permute.xlu0 %v1200
      %1202 = vperm.xlu0 %1201, %v1191
      %v1203 = vpop.permute.xlu0 %1202
      %v1204 = vmul.f32 %v1184, %v1154
      %v1205 = vmul.f32 %v1190, %v1155
      %v1206 = vmul.f32 %v1197, %v1156
      %v1207 = vmul.f32 %v1203, %v1157
      %vm1208 = vcmask 523520
      %v1209 = vsel %vm1208, %v1204, 0.0
      %v1210 = vsel %vm1208, %v1205, 0.0
      %v1211 = vadd.f32 %v1209, %v1210
      %v1212 = vrot.slane %v1211, 4
      %v1213 = vadd.f32 %v1211, %v1212
      %v1214 = vrot.slane %v1213, 2
      %v1215 = vadd.f32 %v1213, %v1214
      %v1216 = vrot.slane %v1215, 1
      %v1217 = vadd.f32 %v1215, %v1216
      %v1218 = vsel %vm1208, %v1206, 0.0
      %v1219 = vsel %vm1208, %v1207, 0.0
      %v1220 = vadd.f32 %v1218, %v1219
      %v1221 = vrot.slane %v1220, 4
      %v1222 = vadd.f32 %v1220, %v1221
      %v1223 = vrot.slane %v1222, 2
      %v1224 = vadd.f32 %v1222, %v1223
      %v1225 = vrot.slane %v1224, 1
      %v1226 = vadd.f32 %v1224, %v1225
      %v1228 = vperm.slane %v246, 0
      %1229 = vrot.lane.b32.xlu0 %v1228, 32
      %v1230 = vpop.permute.xlu0 %1229
      %v1232 = vmul.f32 %v1217, %v1230
      %v1233 = vmul.f32 %v1226, %v1230
      %v1236 = vrot.slane %v1233, 7
      %v1237 = vsel %vm440, %v1236, %v1232
      %1238 = vrot.lane.b32.xlu0 %v1237, 96
      %v1239 = vpop.permute.xlu0 %1238
      %vm1241 = vcmask 254976
      %v1242 = vsel %vm1241, %v1239, 0.0
      %1243 = vadd.xlane.f32.xlu0 %v1242
      %v1244 = vpop.xlane.xlu0 %1243
      %v1245 = vstv %s248
      %v1246 = vadd.f32 %v1244, %v1245
      %v1247 = vsub.f32 0.0, %v1246
      %v1248 = vmul.f32 %v1247, 1.442695
      %v1249 = vpow.pop %v1248
      %v1250 = vadd.f32 %v1249, 1.0
      %v1251 = vrcp.pop %v1250
      %v1252 = vmul.f32 %v1250, %v1251
      %v1253 = vsub.f32 1.0, %v1252
      %v1254 = vmul.f32 %v1251, %v1253
      %v1255 = vadd.f32 %v1251, %v1254
      %vm1256 = vweird.f32 %v1250
      %vm1257 = vweird.f32 %v1251
      %vm1258 = vmor %vm1256, %vm1257
      %v1259 = vsel %vm1258, %v1251, %v1255
      %v1260 = vand.u32 2147483647, %v1250
      %vm1261 = vcmp.eq.f32.partialorder %v1260, 8.507059e+37
      %v1262 = vand.u32 %v1250, 2147483648
      %v1263 = vor.u32 1.1754944e-38, %v1262
      %v1264 = vsel %vm1261, %v1263, %v1259
      %v1265 = vmul.f32 1.0, %v1264
      %v1267 = vperm.slane %v1265, %v241
      %s1269 = scalar_lea.vmem %s24, %s250
      %vm1270 = vcmask 8192
      %1271 = vst.msk [vmem:[%s1269] sm:$0x1] %vm1270, %v1267
    $region142: #{tpu_custom_call.1} parent=1 // loop_footer
      %s254 = sadd.s32 1, %s250
    $region143: #{tpu_custom_call.1} parent=1 // loop_footer_branch
      %249 = sbr.rel target = $region139
    $region144: #{tpu_custom_call.1} parent=1 // loop_exit
      _
    // Predicated region
    $region145: #{tpu_custom_call.1} parent=1 // pred_check
      _
    $region146: #{tpu_custom_call.1} parent=1 // pred_check_branch
      %1273 = sbr.rel (0) target = $region148
    $region147: #{tpu_custom_call.1} parent=1 // pred_region
      _
    $region148: #{tpu_custom_call.1} parent=1 // pred_fallthru
      _
    // Predicated region
    $region149: #{tpu_custom_call.1} parent=1 // pred_check
      _
    $region150: #{tpu_custom_call.1} parent=1 // pred_check_branch
      %1275 = sbr.rel (0) target = $region152
    $region151: #{tpu_custom_call.1} parent=1 // pred_region
      _
    $region152: #{tpu_custom_call.1} parent=1 // pred_fallthru
      _
    %1276 = vsyncpa [#allocation5], 1
    %1277 = vsyncpa [#allocation7], 1
    %1278 = vsyncpa [#allocation10], 1
    %1279 = vsyncpa [#allocation13], 1
    %1280 = vsyncpa [#allocation16], 1
    %1281 = vsyncpa [#allocation19], 1

</llo_original>
